<compile_context>
chip_gen: v6e
topology: v6e:2x2x1
jax: 0.10.0
libtpu: 0.0.40
codegen_flags: <defaults>
</compile_context>

<pallas_src>
import jax
import jax.numpy as jnp
from jax.experimental import pallas as pl
from jax.experimental.pallas import tpu as pltpu

LANE = 128      # lane width: H and O are padded to a multiple of this
SUBLANE = 8     # sublane width: batch tile rows are a multiple of this


def _round_up(x, m):
    return (x + m - 1) // m * m


def _pad_to(x, shape):
    return jnp.pad(x, [(0, s - d) for d, s in zip(x.shape, shape)])


def _full_spec(shape):
    # Whole-array (2-D) block, constant across the batch grid -> fetched once.
    return pl.BlockSpec(shape, lambda i: (0, 0))


def rnn_mlp_kernel(emb_ref, wih_ref, whh_ref, brnn_ref,
                   w1_ref, b1_ref, w2_ref, b2_ref, wo_ref, bo_ref,
                   out_ref):
    """emb_ref: (T, Bt, D); out_ref: (T, Bt, Op).  Bt % 8 == 0, Hp/Op multiples of 128."""
    T, Bt, D = emb_ref.shape
    Hp = whh_ref.shape[0]
    Op = out_ref.shape[-1]
    R = T * Bt

    # --- 1) Input projection hoisted out of the recurrence: ONE batched matmul. ---
    # (T, Bt, D) -> (T*Bt, D): leading-dim collapse with Bt % 8 == 0 is a layout no-op.
    emb2d = emb_ref[...].reshape(R, D)
    xw = (jnp.dot(emb2d, wih_ref[...], preferred_element_type=jnp.float32)
          + brnn_ref[...])                                   # (R, Hp); b_ih + b_hh fused

    # --- 2) Recurrence: only tanh(xw[t] + h @ W_hh) stays on the serial path. ---
    # T is small & static -> full unroll; hidden states live in vregs (one (Bt, Hp)
    # row-block per step), no VMEM scratch, no per-step masked stores.
    whh = whh_ref[...]
    h = jnp.zeros((Bt, Hp), dtype=jnp.float32)
    hs = []
    for t in range(T):
        h = jnp.tanh(xw[t * Bt:(t + 1) * Bt, :]
                     + jnp.dot(h, whh, preferred_element_type=jnp.float32))
        hs.append(h)
    hs_all = jnp.concatenate(hs, axis=0)                     # (R, Hp), same row order as xw

    # --- 3) MLP head batched over all rows; single lane-dense slab writeback. ---
    y = jnp.maximum(jnp.dot(hs_all, w1_ref[...], preferred_element_type=jnp.float32)
                    + b1_ref[...], 0.0)
    y = jnp.maximum(jnp.dot(y, w2_ref[...], preferred_element_type=jnp.float32)
                    + b2_ref[...], 0.0)
    y = jnp.dot(y, wo_ref[...], preferred_element_type=jnp.float32) + bo_ref[...]
    out_ref[...] = y.reshape(T, Bt, Op)                      # leading-dim split: layout no-op


def rnn_forward(token_ids, params, *, tile_b=SUBLANE):
    """token_ids: (B, T) int32 -> (B, T, output_dim) f32 (batch-first, like PyTorch)."""
    assert tile_b % SUBLANE == 0
    # Embedding lookup kept as plain-JAX glue (gather).
    emb = jnp.take(params["embedding"], token_ids, axis=0).astype(jnp.float32)   # (B, T, D)
    B, T, D = emb.shape
    H = params["w_hh"].shape[0]
    O = params["wo"].shape[1]

    Hp = _round_up(H, LANE)
    Op = _round_up(O, LANE)
    Bp = _round_up(B, tile_b)
    nb = Bp // tile_b

    # Wrapper-side layout plumbing: zero-pad params to lane-dense shapes (exact math).
    wih = _pad_to(params["w_ih"], (D, Hp))
    whh = _pad_to(params["w_hh"], (Hp, Hp))
    brnn = _pad_to(params["b_rnn"], (1, Hp))
    w1 = _pad_to(params["w1"], (Hp, Hp)); b1 = _pad_to(params["b1"], (1, Hp))
    w2 = _pad_to(params["w2"], (Hp, Hp)); b2 = _pad_to(params["b2"], (1, Hp))
    wo = _pad_to(params["wo"], (Hp, Op)); bo = _pad_to(params["bo"], (1, Op))

    # Time-major layout: per-step slices inside the kernel are contiguous, 8-aligned rows.
    emb_tm = jnp.transpose(jnp.pad(emb, ((0, Bp - B), (0, 0), (0, 0))), (1, 0, 2))  # (T, Bp, D)

    rows = T * Bp
    flops = 2 * rows * (D * Hp + 3 * Hp * Hp + Hp * Op)
    bytes_accessed = 4 * (rows * D + rows * Op
                          + D * Hp + 3 * Hp * Hp + Hp * Op + 3 * Hp + Op)

    out_tm = pl.pallas_call(
        rnn_mlp_kernel,
        out_shape=jax.ShapeDtypeStruct((T, Bp, Op), jnp.float32),
        grid=(nb,),
        in_specs=[
            pl.BlockSpec((T, tile_b, D), lambda i: (0, i, 0)),   # this grid step's batch tile
            _full_spec((D, Hp)), _full_spec((Hp, Hp)), _full_spec((1, Hp)),
            _full_spec((Hp, Hp)), _full_spec((1, Hp)),
            _full_spec((Hp, Hp)), _full_spec((1, Hp)),
            _full_spec((Hp, Op)), _full_spec((1, Op)),
        ],
        out_specs=pl.BlockSpec((T, tile_b, Op), lambda i: (0, i, 0)),
        compiler_params=pltpu.CompilerParams(dimension_semantics=("parallel",)),
        cost_estimate=pl.CostEstimate(flops=flops,
                                      transcendentals=rows * Hp,
                                      bytes_accessed=bytes_accessed),
    )(emb_tm, wih, whh, brnn, w1, b1, w2, b2, wo, bo)

    # (T, Bp, Op) -> (B, T, O): wrapper-side un-transpose / un-pad.
    return jnp.transpose(out_tm, (1, 0, 2))[:B, :, :O]


def make_params(key, vocab_size, input_dim, hidden_dim, output_dim):
    ks = jax.random.split(key, 10)
    std = 0.1
    n = lambda k, shape: (std * jax.random.normal(k, shape)).astype(jnp.float32)
    return {
        "embedding": n(ks[0], (vocab_size, input_dim)),
        "w_ih": n(ks[1], (input_dim, hidden_dim)),   # transposed vs torch weight_ih_l0
        "w_hh": n(ks[2], (hidden_dim, hidden_dim)),  # transposed vs torch weight_hh_l0
        "b_rnn": n(ks[3], (1, hidden_dim)) + n(ks[4], (1, hidden_dim)),  # b_ih + b_hh
        "w1": n(ks[5], (hidden_dim, hidden_dim)), "b1": n(ks[6], (1, hidden_dim)),
        "w2": n(ks[7], (hidden_dim, hidden_dim)), "b2": n(ks[8], (1, hidden_dim)),
        "wo": n(ks[9], (hidden_dim, output_dim)),
        "bo": jnp.zeros((1, output_dim), jnp.float32) + 0.01,
    }


def rnn_forward_ref(token_ids, params):
    """Pure-JAX reference for correctness checking."""
    emb = jnp.take(params["embedding"], token_ids, axis=0)    # (B, T, D)
    B = emb.shape[0]
    H = params["w_hh"].shape[0]

    def scan_step(h, x_t):
        h_new = jnp.tanh(x_t @ params["w_ih"] + h @ params["w_hh"] + params["b_rnn"])
        return h_new, h_new

    _, hs = jax.lax.scan(scan_step, jnp.zeros((B, H), jnp.float32),
                         jnp.transpose(emb, (1, 0, 2)))       # (T, B, H)
    hs = jnp.transpose(hs, (1, 0, 2))                         # (B, T, H)
    y = jnp.maximum(hs @ params["w1"] + params["b1"], 0.0)
    y = jnp.maximum(y @ params["w2"] + params["b2"], 0.0)
    return y @ params["wo"] + params["bo"]


if __name__ == "__main__":
    # Small, forward-consistent shapes.
    B, T = 2, 8
    vocab_size, input_dim, hidden_dim, output_dim = 32, 16, 32, 8

    key = jax.random.PRNGKey(0)
    k_param, k_tok = jax.random.split(key)
    params = make_params(k_param, vocab_size, input_dim, hidden_dim, output_dim)
    token_ids = jax.random.randint(k_tok, (B, T), 0, vocab_size, dtype=jnp.int32)

    out = rnn_forward(token_ids, params)
    jax.block_until_ready(out)

    ref = rnn_forward_ref(token_ids, params)
    assert out.shape == (B, T, output_dim)
    assert jnp.allclose(out, ref, atol=1e-5, rtol=1e-5)

    print("KERNEL_OK")
</pallas_src>

<mosaic_0001>
module attributes {stable_mosaic.version = 11 : i64} {
  func.func @rnn_mlp_kernel(%arg0: i32, %arg1: memref<8x8x16xf32, #tpu.memory_space<vmem>>, %arg2: memref<16x128xf32, #tpu.memory_space<vmem>>, %arg3: memref<128x128xf32, #tpu.memory_space<vmem>>, %arg4: memref<1x128xf32, #tpu.memory_space<vmem>>, %arg5: memref<128x128xf32, #tpu.memory_space<vmem>>, %arg6: memref<1x128xf32, #tpu.memory_space<vmem>>, %arg7: memref<128x128xf32, #tpu.memory_space<vmem>>, %arg8: memref<1x128xf32, #tpu.memory_space<vmem>>, %arg9: memref<128x128xf32, #tpu.memory_space<vmem>>, %arg10: memref<1x128xf32, #tpu.memory_space<vmem>>, %arg11: memref<8x8x128xf32, #tpu.memory_space<vmem>>) attributes {dimension_semantics = [#tpu.dimension_semantics<parallel>], iteration_bounds = array<i64: 1>, scalar_prefetch = 0 : i64, scratch_operands = 0 : i64, tpu.core_type = #tpu.core_type<tc>, window_params = [{transform_indices = @transform_0, window_bounds = array<i64: 8, 8, 16>}, {pipeline_mode = #tpu.pipeline_mode<synchronous>, transform_indices = @transform_1, window_bounds = array<i64: 16, 128>}, {pipeline_mode = #tpu.pipeline_mode<synchronous>, transform_indices = @transform_2, window_bounds = array<i64: 128, 128>}, {pipeline_mode = #tpu.pipeline_mode<synchronous>, transform_indices = @transform_3, window_bounds = array<i64: 1, 128>}, {pipeline_mode = #tpu.pipeline_mode<synchronous>, transform_indices = @transform_4, window_bounds = array<i64: 128, 128>}, {pipeline_mode = #tpu.pipeline_mode<synchronous>, transform_indices = @transform_5, window_bounds = array<i64: 1, 128>}, {pipeline_mode = #tpu.pipeline_mode<synchronous>, transform_indices = @transform_6, window_bounds = array<i64: 128, 128>}, {pipeline_mode = #tpu.pipeline_mode<synchronous>, transform_indices = @transform_7, window_bounds = array<i64: 1, 128>}, {pipeline_mode = #tpu.pipeline_mode<synchronous>, transform_indices = @transform_8, window_bounds = array<i64: 128, 128>}, {pipeline_mode = #tpu.pipeline_mode<synchronous>, transform_indices = @transform_9, window_bounds = array<i64: 1, 128>}, {transform_indices = @transform_10, window_bounds = array<i64: 8, 8, 128>}]} {
    %c0 = arith.constant 0 : index
    %c0_0 = arith.constant 0 : index
    %c0_1 = arith.constant 0 : index
    %0 = vector.load %arg1[%c0, %c0_0, %c0_1] : memref<8x8x16xf32, #tpu.memory_space<vmem>>, vector<8x8x16xf32>
    %1 = vector.shape_cast %0 : vector<8x8x16xf32> to vector<64x16xf32>
    %c0_2 = arith.constant 0 : index
    %c0_3 = arith.constant 0 : index
    %2 = vector.load %arg2[%c0_2, %c0_3] : memref<16x128xf32, #tpu.memory_space<vmem>>, vector<16x128xf32>
    %cst = arith.constant dense<0.000000e+00> : vector<64x128xf32>
    %3 = tpu.matmul %1, %2, %cst {dimension_numbers = #tpu.dot_dimension_numbers<[1], [0], [0], [1], [0, 0, 1, 1], [], []>} : vector<64x16xf32>, vector<16x128xf32>, vector<64x128xf32> -> vector<64x128xf32>
    %c0_4 = arith.constant 0 : index
    %c0_5 = arith.constant 0 : index
    %4 = vector.load %arg4[%c0_4, %c0_5] : memref<1x128xf32, #tpu.memory_space<vmem>>, vector<1x128xf32>
    %5 = vector.broadcast %4 : vector<1x128xf32> to vector<64x128xf32>
    %6 = arith.addf %3, %5 : vector<64x128xf32>
    %c0_6 = arith.constant 0 : index
    %c0_7 = arith.constant 0 : index
    %7 = vector.load %arg3[%c0_6, %c0_7] : memref<128x128xf32, #tpu.memory_space<vmem>>, vector<128x128xf32>
    %cst_8 = arith.constant 0.000000e+00 : f32
    %8 = vector.broadcast %cst_8 : f32 to vector<8x128xf32>
    %9 = vector.extract_strided_slice %6 {offsets = [0, 0], sizes = [8, 128], strides = [1, 1]} : vector<64x128xf32> to vector<8x128xf32>
    %cst_9 = arith.constant dense<0.000000e+00> : vector<8x128xf32>
    %10 = tpu.matmul %8, %7, %cst_9 {dimension_numbers = #tpu.dot_dimension_numbers<[1], [0], [0], [1], [0, 0, 1, 1], [], []>} : vector<8x128xf32>, vector<128x128xf32>, vector<8x128xf32> -> vector<8x128xf32>
    %11 = arith.addf %9, %10 : vector<8x128xf32>
    %12 = math.tanh %11 : vector<8x128xf32>
    %13 = vector.extract_strided_slice %6 {offsets = [8, 0], sizes = [8, 128], strides = [1, 1]} : vector<64x128xf32> to vector<8x128xf32>
    %cst_10 = arith.constant dense<0.000000e+00> : vector<8x128xf32>
    %14 = tpu.matmul %12, %7, %cst_10 {dimension_numbers = #tpu.dot_dimension_numbers<[1], [0], [0], [1], [0, 0, 1, 1], [], []>} : vector<8x128xf32>, vector<128x128xf32>, vector<8x128xf32> -> vector<8x128xf32>
    %15 = arith.addf %13, %14 : vector<8x128xf32>
    %16 = math.tanh %15 : vector<8x128xf32>
    %17 = vector.extract_strided_slice %6 {offsets = [16, 0], sizes = [8, 128], strides = [1, 1]} : vector<64x128xf32> to vector<8x128xf32>
    %cst_11 = arith.constant dense<0.000000e+00> : vector<8x128xf32>
    %18 = tpu.matmul %16, %7, %cst_11 {dimension_numbers = #tpu.dot_dimension_numbers<[1], [0], [0], [1], [0, 0, 1, 1], [], []>} : vector<8x128xf32>, vector<128x128xf32>, vector<8x128xf32> -> vector<8x128xf32>
    %19 = arith.addf %17, %18 : vector<8x128xf32>
    %20 = math.tanh %19 : vector<8x128xf32>
    %21 = vector.extract_strided_slice %6 {offsets = [24, 0], sizes = [8, 128], strides = [1, 1]} : vector<64x128xf32> to vector<8x128xf32>
    %cst_12 = arith.constant dense<0.000000e+00> : vector<8x128xf32>
    %22 = tpu.matmul %20, %7, %cst_12 {dimension_numbers = #tpu.dot_dimension_numbers<[1], [0], [0], [1], [0, 0, 1, 1], [], []>} : vector<8x128xf32>, vector<128x128xf32>, vector<8x128xf32> -> vector<8x128xf32>
    %23 = arith.addf %21, %22 : vector<8x128xf32>
    %24 = math.tanh %23 : vector<8x128xf32>
    %25 = vector.extract_strided_slice %6 {offsets = [32, 0], sizes = [8, 128], strides = [1, 1]} : vector<64x128xf32> to vector<8x128xf32>
    %cst_13 = arith.constant dense<0.000000e+00> : vector<8x128xf32>
    %26 = tpu.matmul %24, %7, %cst_13 {dimension_numbers = #tpu.dot_dimension_numbers<[1], [0], [0], [1], [0, 0, 1, 1], [], []>} : vector<8x128xf32>, vector<128x128xf32>, vector<8x128xf32> -> vector<8x128xf32>
    %27 = arith.addf %25, %26 : vector<8x128xf32>
    %28 = math.tanh %27 : vector<8x128xf32>
    %29 = vector.extract_strided_slice %6 {offsets = [40, 0], sizes = [8, 128], strides = [1, 1]} : vector<64x128xf32> to vector<8x128xf32>
    %cst_14 = arith.constant dense<0.000000e+00> : vector<8x128xf32>
    %30 = tpu.matmul %28, %7, %cst_14 {dimension_numbers = #tpu.dot_dimension_numbers<[1], [0], [0], [1], [0, 0, 1, 1], [], []>} : vector<8x128xf32>, vector<128x128xf32>, vector<8x128xf32> -> vector<8x128xf32>
    %31 = arith.addf %29, %30 : vector<8x128xf32>
    %32 = math.tanh %31 : vector<8x128xf32>
    %33 = vector.extract_strided_slice %6 {offsets = [48, 0], sizes = [8, 128], strides = [1, 1]} : vector<64x128xf32> to vector<8x128xf32>
    %cst_15 = arith.constant dense<0.000000e+00> : vector<8x128xf32>
    %34 = tpu.matmul %32, %7, %cst_15 {dimension_numbers = #tpu.dot_dimension_numbers<[1], [0], [0], [1], [0, 0, 1, 1], [], []>} : vector<8x128xf32>, vector<128x128xf32>, vector<8x128xf32> -> vector<8x128xf32>
    %35 = arith.addf %33, %34 : vector<8x128xf32>
    %36 = math.tanh %35 : vector<8x128xf32>
    %37 = vector.extract_strided_slice %6 {offsets = [56, 0], sizes = [8, 128], strides = [1, 1]} : vector<64x128xf32> to vector<8x128xf32>
    %cst_16 = arith.constant dense<0.000000e+00> : vector<8x128xf32>
    %38 = tpu.matmul %36, %7, %cst_16 {dimension_numbers = #tpu.dot_dimension_numbers<[1], [0], [0], [1], [0, 0, 1, 1], [], []>} : vector<8x128xf32>, vector<128x128xf32>, vector<8x128xf32> -> vector<8x128xf32>
    %39 = arith.addf %37, %38 : vector<8x128xf32>
    %40 = math.tanh %39 : vector<8x128xf32>
    %41 = tpu.concatenate %12, %16, %20, %24, %28, %32, %36, %40 in 0 : vector<8x128xf32>, vector<8x128xf32>, vector<8x128xf32>, vector<8x128xf32>, vector<8x128xf32>, vector<8x128xf32>, vector<8x128xf32>, vector<8x128xf32> -> vector<64x128xf32>
    %c0_17 = arith.constant 0 : index
    %c0_18 = arith.constant 0 : index
    %42 = vector.load %arg5[%c0_17, %c0_18] : memref<128x128xf32, #tpu.memory_space<vmem>>, vector<128x128xf32>
    %cst_19 = arith.constant dense<0.000000e+00> : vector<64x128xf32>
    %43 = tpu.matmul %41, %42, %cst_19 {dimension_numbers = #tpu.dot_dimension_numbers<[1], [0], [0], [1], [0, 0, 1, 1], [], []>} : vector<64x128xf32>, vector<128x128xf32>, vector<64x128xf32> -> vector<64x128xf32>
    %c0_20 = arith.constant 0 : index
    %c0_21 = arith.constant 0 : index
    %44 = vector.load %arg6[%c0_20, %c0_21] : memref<1x128xf32, #tpu.memory_space<vmem>>, vector<1x128xf32>
    %45 = vector.broadcast %44 : vector<1x128xf32> to vector<64x128xf32>
    %46 = arith.addf %43, %45 : vector<64x128xf32>
    %cst_22 = arith.constant 0.000000e+00 : f32
    %47 = vector.broadcast %cst_22 : f32 to vector<64x128xf32>
    %48 = arith.maximumf %46, %47 : vector<64x128xf32>
    %c0_23 = arith.constant 0 : index
    %c0_24 = arith.constant 0 : index
    %49 = vector.load %arg7[%c0_23, %c0_24] : memref<128x128xf32, #tpu.memory_space<vmem>>, vector<128x128xf32>
    %cst_25 = arith.constant dense<0.000000e+00> : vector<64x128xf32>
    %50 = tpu.matmul %48, %49, %cst_25 {dimension_numbers = #tpu.dot_dimension_numbers<[1], [0], [0], [1], [0, 0, 1, 1], [], []>} : vector<64x128xf32>, vector<128x128xf32>, vector<64x128xf32> -> vector<64x128xf32>
    %c0_26 = arith.constant 0 : index
    %c0_27 = arith.constant 0 : index
    %51 = vector.load %arg8[%c0_26, %c0_27] : memref<1x128xf32, #tpu.memory_space<vmem>>, vector<1x128xf32>
    %52 = vector.broadcast %51 : vector<1x128xf32> to vector<64x128xf32>
    %53 = arith.addf %50, %52 : vector<64x128xf32>
    %cst_28 = arith.constant 0.000000e+00 : f32
    %54 = vector.broadcast %cst_28 : f32 to vector<64x128xf32>
    %55 = arith.maximumf %53, %54 : vector<64x128xf32>
    %c0_29 = arith.constant 0 : index
    %c0_30 = arith.constant 0 : index
    %56 = vector.load %arg9[%c0_29, %c0_30] : memref<128x128xf32, #tpu.memory_space<vmem>>, vector<128x128xf32>
    %cst_31 = arith.constant dense<0.000000e+00> : vector<64x128xf32>
    %57 = tpu.matmul %55, %56, %cst_31 {dimension_numbers = #tpu.dot_dimension_numbers<[1], [0], [0], [1], [0, 0, 1, 1], [], []>} : vector<64x128xf32>, vector<128x128xf32>, vector<64x128xf32> -> vector<64x128xf32>
    %c0_32 = arith.constant 0 : index
    %c0_33 = arith.constant 0 : index
    %58 = vector.load %arg10[%c0_32, %c0_33] : memref<1x128xf32, #tpu.memory_space<vmem>>, vector<1x128xf32>
    %59 = vector.broadcast %58 : vector<1x128xf32> to vector<64x128xf32>
    %60 = arith.addf %57, %59 : vector<64x128xf32>
    %61 = vector.shape_cast %60 : vector<64x128xf32> to vector<8x8x128xf32>
    %c0_34 = arith.constant 0 : index
    %c0_35 = arith.constant 0 : index
    %c0_36 = arith.constant 0 : index
    %62 = vector.load %arg11[%c0_34, %c0_35, %c0_36] : memref<8x8x128xf32, #tpu.memory_space<vmem>>, vector<8x8x128xf32>
    tpu.vector_store %arg11[%c0_34, %c0_35, %c0_36], %61 {strides = array<i32>} : memref<8x8x128xf32, #tpu.memory_space<vmem>>, vector<8x8x128xf32>,
    return
  }
  func.func @transform_0(%arg0: i32) -> (i32, i32, i32) {
    %c0_i32 = arith.constant 0 : i32
    %c0_i32_0 = arith.constant 0 : i32
    %c0_i32_1 = arith.constant 0 : i32
    return %c0_i32, %arg0, %c0_i32_0 : i32, i32, i32
  }
  func.func @transform_1(%arg0: i32) -> (i32, i32) {
    %c0_i32 = arith.constant 0 : i32
    %c0_i32_0 = arith.constant 0 : i32
    %c0_i32_1 = arith.constant 0 : i32
    return %c0_i32, %c0_i32_0 : i32, i32
  }
  func.func @transform_2(%arg0: i32) -> (i32, i32) {
    %c0_i32 = arith.constant 0 : i32
    %c0_i32_0 = arith.constant 0 : i32
    %c0_i32_1 = arith.constant 0 : i32
    return %c0_i32, %c0_i32_0 : i32, i32
  }
  func.func @transform_3(%arg0: i32) -> (i32, i32) {
    %c0_i32 = arith.constant 0 : i32
    %c0_i32_0 = arith.constant 0 : i32
    %c0_i32_1 = arith.constant 0 : i32
    return %c0_i32, %c0_i32_0 : i32, i32
  }
  func.func @transform_4(%arg0: i32) -> (i32, i32) {
    %c0_i32 = arith.constant 0 : i32
    %c0_i32_0 = arith.constant 0 : i32
    %c0_i32_1 = arith.constant 0 : i32
    return %c0_i32, %c0_i32_0 : i32, i32
  }
  func.func @transform_5(%arg0: i32) -> (i32, i32) {
    %c0_i32 = arith.constant 0 : i32
    %c0_i32_0 = arith.constant 0 : i32
    %c0_i32_1 = arith.constant 0 : i32
    return %c0_i32, %c0_i32_0 : i32, i32
  }
  func.func @transform_6(%arg0: i32) -> (i32, i32) {
    %c0_i32 = arith.constant 0 : i32
    %c0_i32_0 = arith.constant 0 : i32
    %c0_i32_1 = arith.constant 0 : i32
    return %c0_i32, %c0_i32_0 : i32, i32
  }
  func.func @transform_7(%arg0: i32) -> (i32, i32) {
    %c0_i32 = arith.constant 0 : i32
    %c0_i32_0 = arith.constant 0 : i32
    %c0_i32_1 = arith.constant 0 : i32
    return %c0_i32, %c0_i32_0 : i32, i32
  }
  func.func @transform_8(%arg0: i32) -> (i32, i32) {
    %c0_i32 = arith.constant 0 : i32
    %c0_i32_0 = arith.constant 0 : i32
    %c0_i32_1 = arith.constant 0 : i32
    return %c0_i32, %c0_i32_0 : i32, i32
  }
  func.func @transform_9(%arg0: i32) -> (i32, i32) {
    %c0_i32 = arith.constant 0 : i32
    %c0_i32_0 = arith.constant 0 : i32
    %c0_i32_1 = arith.constant 0 : i32
    return %c0_i32, %c0_i32_0 : i32, i32
  }
  func.func @transform_10(%arg0: i32) -> (i32, i32, i32) {
    %c0_i32 = arith.constant 0 : i32
    %c0_i32_0 = arith.constant 0 : i32
    %c0_i32_1 = arith.constant 0 : i32
    return %c0_i32, %arg0, %c0_i32_0 : i32, i32, i32
  }
}

</mosaic_0001>

<llo_original>
// kernel: tpu_custom_call.1
$region0: #{tpu_custom_call.1}
  #allocation0 [shape = 'u32[]', space=smem, size = 0x4, offset = 0x4, fixed_abs, tag = 'smem constant byte address 0x4 - core index']
  #allocation1 [shape = 'u32[144,128]{1,0:T(1,128)}', space=vmem, size = 0x12000, scoped, tag = 'internal scratch']
  %s0 = inlined_call_operand.hbm [shape: f32[8,8,16], index: 0, kind: input, shape index: {}]
  %s1 = inlined_call_operand.hbm [shape: f32[16,128], index: 1, kind: input, shape index: {}]
  %s2 = inlined_call_operand.hbm [shape: f32[128,128], index: 2, kind: input, shape index: {}]
  %s3 = inlined_call_operand.vmem [shape: f32[1,128], index: 3, kind: input, shape index: {}]
  %s4 = inlined_call_operand.hbm [shape: f32[128,128], index: 4, kind: input, shape index: {}]
  %s5 = inlined_call_operand.vmem [shape: f32[1,128], index: 5, kind: input, shape index: {}]
  %s6 = inlined_call_operand.hbm [shape: f32[128,128], index: 6, kind: input, shape index: {}]
  %s7 = inlined_call_operand.vmem [shape: f32[1,128], index: 7, kind: input, shape index: {}]
  %s8 = inlined_call_operand.hbm [shape: f32[128,128], index: 8, kind: input, shape index: {}]
  %s9 = inlined_call_operand.vmem [shape: f32[1,128], index: 9, kind: input, shape index: {}]
  %s10 = inlined_call_operand.hbm [shape: f32[8,8,128], index: 10, kind: output, shape index: {}]
  %s11 = sld [smem:[#allocation0]]
  $region74: #{tpu_custom_call.1} parent=0
    _
  %s13 = ssub.s32 1, %s11
  %s14 = scalar_select 0, %s13, %s11
  $region1: #{tpu_custom_call.1} parent=0
    #allocation2 [shape = 'u8[32768]{0}', space=vmem, size = 0x8000, scoped, tag = 'input window, operand 0, single buffered']
    #allocation3 [shape = 's32[1]{0}', space=sflag, size = 0x4, scoped, tag = 'scoped memory for tpu_custom_call.1']
    #allocation4 [shape = 's32[1]{0}', space=sflag, size = 0x4, scoped, tag = 'scoped memory for tpu_custom_call.1']
    #allocation5 [shape = 'u8[8192]{0}', space=vmem, size = 0x2000, scoped, tag = 'input window, operand 1, single buffered']
    #allocation6 [shape = 's32[1]{0}', space=sflag, size = 0x4, scoped, tag = 'scoped memory for tpu_custom_call.1']
    #allocation7 [shape = 'u8[65536]{0}', space=vmem, size = 0x10000, scoped, tag = 'input window, operand 2, single buffered']
    #allocation8 [shape = 'u8[65536]{0}', space=vmem, size = 0x10000, scoped, tag = 'input window, operand 4, single buffered']
    #allocation9 [shape = 's32[1]{0}', space=sflag, size = 0x4, scoped, tag = 'scoped memory for tpu_custom_call.1']
    #allocation10 [shape = 'u8[65536]{0}', space=vmem, size = 0x10000, scoped, tag = 'input window, operand 6, single buffered']
    #allocation11 [shape = 'u8[65536]{0}', space=vmem, size = 0x10000, scoped, tag = 'input window, operand 8, single buffered']
    #allocation12 [shape = 's32[1]{0}', space=sflag, size = 0x4, scoped, tag = 'scoped memory for tpu_custom_call.1']
    #allocation13 [shape = 'u8[32768]{0}', space=vmem, size = 0x8000, scoped, tag = 'output window, operand 0, single buffered']
    %15 = vsyncpa [#allocation3], 0
    %16 = vsyncpa [#allocation6], 0
    %17 = vsyncpa [#allocation9], 0
    %18 = vsyncpa [#allocation12], 0
    %19 = vsyncpa [#allocation4], 0
    // Predicated region
    $region2: #{tpu_custom_call.1} parent=1 // pred_check
      _
    $region3: #{tpu_custom_call.1} parent=1 // pred_check_branch
      %21 = sbr.rel (0) target = $region5
    $region4: #{tpu_custom_call.1} parent=1 // pred_region
      %s23 = ssub.s32 1024, 1024
      %24 = vsyncadd [#allocation3], %s23
      %s25 = sshll.u32 [#allocation2], 4
      %s26 = int_to_ptr.vmem [resolvable:$true] %s25
      %31 = dma.hbm_to_vmem [thread:$0]  %s0, 1024, %s26, [#allocation3], 128, 128, 8
    $region5: #{tpu_custom_call.1} parent=1 // pred_fallthru
      _
    // Predicated region
    $region6: #{tpu_custom_call.1} parent=1 // pred_check
      _
    $region7: #{tpu_custom_call.1} parent=1 // pred_check_branch
      %33 = sbr.rel (0) target = $region9
    $region8: #{tpu_custom_call.1} parent=1 // pred_region
      %s35 = ssub.s32 256, 256
      %36 = vsyncadd [#allocation6], %s35
      %s37 = sshll.u32 [#allocation5], 4
      %s38 = int_to_ptr.vmem [resolvable:$true] %s37
      %43 = dma.hbm_to_vmem [thread:$0]  %s1, 256, %s38, [#allocation6], 128, 128, 8
    $region9: #{tpu_custom_call.1} parent=1 // pred_fallthru
      _
    // Predicated region
    $region10: #{tpu_custom_call.1} parent=1 // pred_check
      _
    $region11: #{tpu_custom_call.1} parent=1 // pred_check_branch
      %45 = sbr.rel (0) target = $region13
    $region12: #{tpu_custom_call.1} parent=1 // pred_region
      %s47 = ssub.s32 2048, 2048
      %48 = vsyncadd [#allocation6], %s47
      %s49 = sshll.u32 [#allocation7], 4
      %s50 = int_to_ptr.vmem [resolvable:$true] %s49
      %55 = dma.hbm_to_vmem [thread:$0]  %s2, 2048, %s50, [#allocation6], 128, 128, 8
    $region13: #{tpu_custom_call.1} parent=1 // pred_fallthru
      _
    // Predicated region
    $region14: #{tpu_custom_call.1} parent=1 // pred_check
      _
    $region15: #{tpu_custom_call.1} parent=1 // pred_check_branch
      %57 = sbr.rel (0) target = $region17
    $region16: #{tpu_custom_call.1} parent=1 // pred_region
      _
    $region17: #{tpu_custom_call.1} parent=1 // pred_fallthru
      _
    // Predicated region
    $region18: #{tpu_custom_call.1} parent=1 // pred_check
      _
    $region19: #{tpu_custom_call.1} parent=1 // pred_check_branch
      %59 = sbr.rel (0) target = $region21
    $region20: #{tpu_custom_call.1} parent=1 // pred_region
      %s61 = ssub.s32 2048, 2048
      %62 = vsyncadd [#allocation9], %s61
      %s63 = sshll.u32 [#allocation8], 4
      %s64 = int_to_ptr.vmem [resolvable:$true] %s63
      %69 = dma.hbm_to_vmem [thread:$0]  %s4, 2048, %s64, [#allocation9], 128, 128, 8
    $region21: #{tpu_custom_call.1} parent=1 // pred_fallthru
      _
    // Predicated region
    $region22: #{tpu_custom_call.1} parent=1 // pred_check
      _
    $region23: #{tpu_custom_call.1} parent=1 // pred_check_branch
      %71 = sbr.rel (0) target = $region25
    $region24: #{tpu_custom_call.1} parent=1 // pred_region
      _
    $region25: #{tpu_custom_call.1} parent=1 // pred_fallthru
      _
    // Predicated region
    $region26: #{tpu_custom_call.1} parent=1 // pred_check
      _
    $region27: #{tpu_custom_call.1} parent=1 // pred_check_branch
      %73 = sbr.rel (0) target = $region29
    $region28: #{tpu_custom_call.1} parent=1 // pred_region
      %s75 = ssub.s32 2048, 2048
      %76 = vsyncadd [#allocation9], %s75
      %s77 = sshll.u32 [#allocation10], 4
      %s78 = int_to_ptr.vmem [resolvable:$true] %s77
      %83 = dma.hbm_to_vmem [thread:$0]  %s6, 2048, %s78, [#allocation9], 128, 128, 8
    $region29: #{tpu_custom_call.1} parent=1 // pred_fallthru
      _
    // Predicated region
    $region30: #{tpu_custom_call.1} parent=1 // pred_check
      _
    $region31: #{tpu_custom_call.1} parent=1 // pred_check_branch
      %85 = sbr.rel (0) target = $region33
    $region32: #{tpu_custom_call.1} parent=1 // pred_region
      _
    $region33: #{tpu_custom_call.1} parent=1 // pred_fallthru
      _
    // Predicated region
    $region34: #{tpu_custom_call.1} parent=1 // pred_check
      _
    $region35: #{tpu_custom_call.1} parent=1 // pred_check_branch
      %87 = sbr.rel (0) target = $region37
    $region36: #{tpu_custom_call.1} parent=1 // pred_region
      %s89 = ssub.s32 2048, 2048
      %90 = vsyncadd [#allocation12], %s89
      %s91 = sshll.u32 [#allocation11], 4
      %s92 = int_to_ptr.vmem [resolvable:$true] %s91
      %97 = dma.hbm_to_vmem [thread:$0]  %s8, 2048, %s92, [#allocation12], 128, 128, 8
    $region37: #{tpu_custom_call.1} parent=1 // pred_fallthru
      _
    // Predicated region
    $region38: #{tpu_custom_call.1} parent=1 // pred_check
      _
    $region39: #{tpu_custom_call.1} parent=1 // pred_check_branch
      %99 = sbr.rel (0) target = $region41
    $region40: #{tpu_custom_call.1} parent=1 // pred_region
      _
    $region41: #{tpu_custom_call.1} parent=1 // pred_fallthru
      _
    // Predicated region
    $region42: #{tpu_custom_call.1} parent=1 // pred_check
      _
    $region43: #{tpu_custom_call.1} parent=1 // pred_check_branch
      %101 = sbr.rel (0) target = $region45
    $region44: #{tpu_custom_call.1} parent=1 // pred_region
      %102 = dma.done [#allocation3], 1024
    $region45: #{tpu_custom_call.1} parent=1 // pred_fallthru
      _
    // Predicated region
    $region46: #{tpu_custom_call.1} parent=1 // pred_check
      _
    $region47: #{tpu_custom_call.1} parent=1 // pred_check_branch
      %104 = sbr.rel (0) target = $region49
    $region48: #{tpu_custom_call.1} parent=1 // pred_region
      %105 = dma.done [#allocation6], 256
    $region49: #{tpu_custom_call.1} parent=1 // pred_fallthru
      _
    // Predicated region
    $region50: #{tpu_custom_call.1} parent=1 // pred_check
      _
    $region51: #{tpu_custom_call.1} parent=1 // pred_check_branch
      %107 = sbr.rel (0) target = $region53
    $region52: #{tpu_custom_call.1} parent=1 // pred_region
      %108 = dma.done [#allocation6], 2048
    $region53: #{tpu_custom_call.1} parent=1 // pred_fallthru
      _
    // Predicated region
    $region54: #{tpu_custom_call.1} parent=1 // pred_check
      _
    $region55: #{tpu_custom_call.1} parent=1 // pred_check_branch
      %110 = sbr.rel (0) target = $region57
    $region56: #{tpu_custom_call.1} parent=1 // pred_region
      %111 = dma.done [#allocation9], 2048
    $region57: #{tpu_custom_call.1} parent=1 // pred_fallthru
      _
    // Predicated region
    $region58: #{tpu_custom_call.1} parent=1 // pred_check
      _
    $region59: #{tpu_custom_call.1} parent=1 // pred_check_branch
      %113 = sbr.rel (0) target = $region61
    $region60: #{tpu_custom_call.1} parent=1 // pred_region
      %114 = dma.done [#allocation9], 2048
    $region61: #{tpu_custom_call.1} parent=1 // pred_fallthru
      _
    // Predicated region
    $region62: #{tpu_custom_call.1} parent=1 // pred_check
      _
    $region63: #{tpu_custom_call.1} parent=1 // pred_check_branch
      %116 = sbr.rel (0) target = $region65
    $region64: #{tpu_custom_call.1} parent=1 // pred_region
      %117 = dma.done [#allocation12], 2048
    $region65: #{tpu_custom_call.1} parent=1 // pred_fallthru
      _
    %v118 = vld [vmem:[#allocation2] sm:$0xff]
    %v119 = vld [vmem:[#allocation2 + $0x8] sm:$0xff]
    %v120 = vld [vmem:[#allocation2 + $0x10] sm:$0xff]
    %v121 = vld [vmem:[#allocation2 + $0x18] sm:$0xff]
    %v122 = vld [vmem:[#allocation2 + $0x20] sm:$0xff]
    %v123 = vld [vmem:[#allocation2 + $0x28] sm:$0xff]
    %v124 = vld [vmem:[#allocation2 + $0x30] sm:$0xff]
    %v125 = vld [vmem:[#allocation2 + $0x38] sm:$0xff]
    %v126 = vld [vmem:[#allocation5] sm:$0xff]
    %v127 = vld [vmem:[#allocation5 + $0x8] sm:$0xff]
    %v128 = vld [vmem:[%s3] sm:$0x1]
    %v130 = vlaneseq
    %v131 = vshrl.u32 %v130, 7
    %v132 = vsub.s32 0, %v131
    %v133 = vrot.slane %v128, %v132
    %vm135 = vcmask 130048
    %v137 = vsel %vm135, %v118, 0
    %v140 = vsel %vm135, %v119, 0
    %v143 = vsel %vm135, %v120, 0
    %v146 = vsel %vm135, %v121, 0
    %v149 = vsel %vm135, %v122, 0
    %v152 = vsel %vm135, %v123, 0
    %v155 = vsel %vm135, %v124, 0
    %v158 = vsel %vm135, %v125, 0
    %160 = vmatprep.subr.mxu0 0.0
    %161 = vmatpush1.msra.mxu0 0.0
    %162 = vmatprep.subr.mxu0 0.0
    %163 = vmatpush1.msra.mxu0 0.0
    %164 = vmatprep.subr.mxu0 0.0
    %165 = vmatpush1.msra.mxu0 0.0
    %166 = vmatprep.subr.mxu0 0.0
    %167 = vmatpush1.msra.mxu0 0.0
    %168 = vmatprep.subr.mxu0 0.0
    %169 = vmatpush1.msra.mxu0 0.0
    %170 = vmatprep.subr.mxu0 0.0
    %171 = vmatpush1.msra.mxu0 0.0
    %172 = vmatprep.subr.mxu0 0.0
    %173 = vmatpush1.msra.mxu0 0.0
    %174 = vmatprep.subr.mxu0 0.0
    %175 = vmatpush1.msra.mxu0 0.0
    %176 = vmatprep.subr.mxu0 0.0
    %177 = vmatpush1.msra.mxu0 0.0
    %178 = vmatprep.subr.mxu0 0.0
    %179 = vmatpush1.msra.mxu0 0.0
    %180 = vmatprep.subr.mxu0 0.0
    %181 = vmatpush1.msra.mxu0 0.0
    %182 = vmatprep.subr.mxu0 0.0
    %183 = vmatpush1.msra.mxu0 0.0
    %184 = vmatprep.subr.mxu0 0.0
    %185 = vmatpush1.msra.mxu0 0.0
    %186 = vmatprep.subr.mxu0 0.0
    %187 = vmatpush1.msra.mxu0 0.0
    %188 = vmatprep.subr.mxu0 0.0
    %189 = vmatpush1.msra.mxu0 %v127
    %190 = vmatprep.subr.mxu0 0.0
    %191 = vmatpush1.msra.mxu0 %v126
    %192 = vmatprep.subr.mxu0 0.0
    %193 = vmatpush2.msra.mxu0 0.0
    %194 = vmatprep.subr.mxu0 0.0
    %195 = vmatpush2.msra.mxu0 0.0
    %196 = vmatprep.subr.mxu0 0.0
    %197 = vmatpush2.msra.mxu0 0.0
    %198 = vmatprep.subr.mxu0 0.0
    %199 = vmatpush2.msra.mxu0 0.0
    %200 = vmatprep.subr.mxu0 0.0
    %201 = vmatpush2.msra.mxu0 0.0
    %202 = vmatprep.subr.mxu0 0.0
    %203 = vmatpush2.msra.mxu0 0.0
    %204 = vmatprep.subr.mxu0 0.0
    %205 = vmatpush2.msra.mxu0 0.0
    %206 = vmatprep.subr.mxu0 0.0
    %207 = vmatpush2.msra.mxu0 0.0
    %208 = vmatprep.subr.mxu0 0.0
    %209 = vmatpush2.msra.mxu0 0.0
    %210 = vmatprep.subr.mxu0 0.0
    %211 = vmatpush2.msra.mxu0 0.0
    %212 = vmatprep.subr.mxu0 0.0
    %213 = vmatpush2.msra.mxu0 0.0
    %214 = vmatprep.subr.mxu0 0.0
    %215 = vmatpush2.msra.mxu0 0.0
    %216 = vmatprep.subr.mxu0 0.0
    %217 = vmatpush2.msra.mxu0 0.0
    %218 = vmatprep.subr.mxu0 0.0
    %219 = vmatpush2.msra.mxu0 0.0
    %220 = vmatprep.subr.mxu0 0.0
    %221 = vmatpush2.msra.mxu0 0.0
    %222 = vmatprep.subr.mxu0 0.0
    %223 = vmatpush2.msra.mxu0 0.0
    %224 = vmatprep.mubr.f32.mxu0 0.0
    %225 = vmatmul.mubr.f32.gmra.mxu0 %v137
    %v226 = vpop.f32.mrf.mxu0
    %v227 = vadd.f32 %v133, %v226
    %v228 = vpop.f32.mrf.mxu0
    %229 = vmatprep.mubr.f32.mxu0 0.0
    %230 = vmatmul.mubr.f32.gmra.mxu0 %v140
    %v231 = vpop.f32.mrf.mxu0
    %v232 = vadd.f32 %v133, %v231
    %v233 = vpop.f32.mrf.mxu0
    %234 = vmatprep.mubr.f32.mxu0 0.0
    %235 = vmatmul.mubr.f32.gmra.mxu0 %v143
    %v236 = vpop.f32.mrf.mxu0
    %v237 = vadd.f32 %v133, %v236
    %v238 = vpop.f32.mrf.mxu0
    %239 = vmatprep.mubr.f32.mxu0 0.0
    %240 = vmatmul.mubr.f32.gmra.mxu0 %v146
    %v241 = vpop.f32.mrf.mxu0
    %v242 = vadd.f32 %v133, %v241
    %v243 = vpop.f32.mrf.mxu0
    %244 = vmatprep.mubr.f32.mxu0 0.0
    %245 = vmatmul.mubr.f32.gmra.mxu0 %v149
    %v246 = vpop.f32.mrf.mxu0
    %v247 = vadd.f32 %v133, %v246
    %v248 = vpop.f32.mrf.mxu0
    %249 = vmatprep.mubr.f32.mxu0 0.0
    %250 = vmatmul.mubr.f32.gmra.mxu0 %v152
    %v251 = vpop.f32.mrf.mxu0
    %v252 = vadd.f32 %v133, %v251
    %v253 = vpop.f32.mrf.mxu0
    %254 = vmatprep.mubr.f32.mxu0 0.0
    %255 = vmatmul.mubr.f32.gmra.mxu0 %v155
    %v256 = vpop.f32.mrf.mxu0
    %v257 = vadd.f32 %v133, %v256
    %v258 = vpop.f32.mrf.mxu0
    %259 = vmatprep.mubr.f32.mxu0 0.0
    %260 = vmatmul.mubr.f32.gmra.mxu0 %v158
    %v261 = vpop.f32.mrf.mxu0
    %v262 = vadd.f32 %v133, %v261
    %v263 = vpop.f32.mrf.mxu0
    %264 = vdwg.mxu0
    %v265 = vld [vmem:[#allocation7] sm:$0xff]
    %v266 = vld [vmem:[#allocation7 + $0x8] sm:$0xff]
    %v267 = vld [vmem:[#allocation7 + $0x10] sm:$0xff]
    %v268 = vld [vmem:[#allocation7 + $0x18] sm:$0xff]
    %v269 = vld [vmem:[#allocation7 + $0x20] sm:$0xff]
    %v270 = vld [vmem:[#allocation7 + $0x28] sm:$0xff]
    %v271 = vld [vmem:[#allocation7 + $0x30] sm:$0xff]
    %v272 = vld [vmem:[#allocation7 + $0x38] sm:$0xff]
    %v273 = vld [vmem:[#allocation7 + $0x40] sm:$0xff]
    %v274 = vld [vmem:[#allocation7 + $0x48] sm:$0xff]
    %v275 = vld [vmem:[#allocation7 + $0x50] sm:$0xff]
    %v276 = vld [vmem:[#allocation7 + $0x58] sm:$0xff]
    %v277 = vld [vmem:[#allocation7 + $0x60] sm:$0xff]
    %v278 = vld [vmem:[#allocation7 + $0x68] sm:$0xff]
    %v279 = vld [vmem:[#allocation7 + $0x70] sm:$0xff]
    %v280 = vld [vmem:[#allocation7 + $0x78] sm:$0xff]
    %281 = vmatprep.subr.mxu0 0.0
    %282 = vmatpush1.msra.mxu0 %v280
    %283 = vmatprep.subr.mxu0 0.0
    %284 = vmatpush1.msra.mxu0 %v279
    %285 = vmatprep.subr.mxu0 0.0
    %286 = vmatpush1.msra.mxu0 %v278
    %287 = vmatprep.subr.mxu0 0.0
    %288 = vmatpush1.msra.mxu0 %v277
    %289 = vmatprep.subr.mxu0 0.0
    %290 = vmatpush1.msra.mxu0 %v276
    %291 = vmatprep.subr.mxu0 0.0
    %292 = vmatpush1.msra.mxu0 %v275
    %293 = vmatprep.subr.mxu0 0.0
    %294 = vmatpush1.msra.mxu0 %v274
    %295 = vmatprep.subr.mxu0 0.0
    %296 = vmatpush1.msra.mxu0 %v273
    %297 = vmatprep.subr.mxu0 0.0
    %298 = vmatpush1.msra.mxu0 %v272
    %299 = vmatprep.subr.mxu0 0.0
    %300 = vmatpush1.msra.mxu0 %v271
    %301 = vmatprep.subr.mxu0 0.0
    %302 = vmatpush1.msra.mxu0 %v270
    %303 = vmatprep.subr.mxu0 0.0
    %304 = vmatpush1.msra.mxu0 %v269
    %305 = vmatprep.subr.mxu0 0.0
    %306 = vmatpush1.msra.mxu0 %v268
    %307 = vmatprep.subr.mxu0 0.0
    %308 = vmatpush1.msra.mxu0 %v267
    %309 = vmatprep.subr.mxu0 0.0
    %310 = vmatpush1.msra.mxu0 %v266
    %311 = vmatprep.subr.mxu0 0.0
    %312 = vmatpush1.msra.mxu0 %v265
    %313 = vmatprep.subr.mxu0 0.0
    %314 = vmatpush2.msra.mxu0 0.0
    %315 = vmatprep.subr.mxu0 0.0
    %316 = vmatpush2.msra.mxu0 0.0
    %317 = vmatprep.subr.mxu0 0.0
    %318 = vmatpush2.msra.mxu0 0.0
    %319 = vmatprep.subr.mxu0 0.0
    %320 = vmatpush2.msra.mxu0 0.0
    %321 = vmatprep.subr.mxu0 0.0
    %322 = vmatpush2.msra.mxu0 0.0
    %323 = vmatprep.subr.mxu0 0.0
    %324 = vmatpush2.msra.mxu0 0.0
    %325 = vmatprep.subr.mxu0 0.0
    %326 = vmatpush2.msra.mxu0 0.0
    %327 = vmatprep.subr.mxu0 0.0
    %328 = vmatpush2.msra.mxu0 0.0
    %329 = vmatprep.subr.mxu0 0.0
    %330 = vmatpush2.msra.mxu0 0.0
    %331 = vmatprep.subr.mxu0 0.0
    %332 = vmatpush2.msra.mxu0 0.0
    %333 = vmatprep.subr.mxu0 0.0
    %334 = vmatpush2.msra.mxu0 0.0
    %335 = vmatprep.subr.mxu0 0.0
    %336 = vmatpush2.msra.mxu0 0.0
    %337 = vmatprep.subr.mxu0 0.0
    %338 = vmatpush2.msra.mxu0 0.0
    %339 = vmatprep.subr.mxu0 0.0
    %340 = vmatpush2.msra.mxu0 0.0
    %341 = vmatprep.subr.mxu0 0.0
    %342 = vmatpush2.msra.mxu0 0.0
    %343 = vmatprep.subr.mxu0 0.0
    %344 = vmatpush2.msra.mxu0 0.0
    %345 = vmatprep.mubr.f32.mxu0 0.0
    %346 = vmatmul.mubr.f32.gmra.mxu0 0.0
    %v347 = vpop.f32.mrf.mxu0
    %v348 = vadd.f32 0.0, %v347
    %v349 = vpop.f32.mrf.mxu0
    %350 = vdwg.mxu0
    %v351 = vadd.f32 %v227, %v348
    %v352 = vtanh.pop %v351
    %353 = vmatprep.subr.mxu0 0.0
    %354 = vmatpush1.msra.mxu0 %v280
    %355 = vmatprep.subr.mxu0 0.0
    %356 = vmatpush1.msra.mxu0 %v279
    %357 = vmatprep.subr.mxu0 0.0
    %358 = vmatpush1.msra.mxu0 %v278
    %359 = vmatprep.subr.mxu0 0.0
    %360 = vmatpush1.msra.mxu0 %v277
    %361 = vmatprep.subr.mxu0 0.0
    %362 = vmatpush1.msra.mxu0 %v276
    %363 = vmatprep.subr.mxu0 0.0
    %364 = vmatpush1.msra.mxu0 %v275
    %365 = vmatprep.subr.mxu0 0.0
    %366 = vmatpush1.msra.mxu0 %v274
    %367 = vmatprep.subr.mxu0 0.0
    %368 = vmatpush1.msra.mxu0 %v273
    %369 = vmatprep.subr.mxu0 0.0
    %370 = vmatpush1.msra.mxu0 %v272
    %371 = vmatprep.subr.mxu0 0.0
    %372 = vmatpush1.msra.mxu0 %v271
    %373 = vmatprep.subr.mxu0 0.0
    %374 = vmatpush1.msra.mxu0 %v270
    %375 = vmatprep.subr.mxu0 0.0
    %376 = vmatpush1.msra.mxu0 %v269
    %377 = vmatprep.subr.mxu0 0.0
    %378 = vmatpush1.msra.mxu0 %v268
    %379 = vmatprep.subr.mxu0 0.0
    %380 = vmatpush1.msra.mxu0 %v267
    %381 = vmatprep.subr.mxu0 0.0
    %382 = vmatpush1.msra.mxu0 %v266
    %383 = vmatprep.subr.mxu0 0.0
    %384 = vmatpush1.msra.mxu0 %v265
    %385 = vmatprep.subr.mxu0 0.0
    %386 = vmatpush2.msra.mxu0 0.0
    %387 = vmatprep.subr.mxu0 0.0
    %388 = vmatpush2.msra.mxu0 0.0
    %389 = vmatprep.subr.mxu0 0.0
    %390 = vmatpush2.msra.mxu0 0.0
    %391 = vmatprep.subr.mxu0 0.0
    %392 = vmatpush2.msra.mxu0 0.0
    %393 = vmatprep.subr.mxu0 0.0
    %394 = vmatpush2.msra.mxu0 0.0
    %395 = vmatprep.subr.mxu0 0.0
    %396 = vmatpush2.msra.mxu0 0.0
    %397 = vmatprep.subr.mxu0 0.0
    %398 = vmatpush2.msra.mxu0 0.0
    %399 = vmatprep.subr.mxu0 0.0
    %400 = vmatpush2.msra.mxu0 0.0
    %401 = vmatprep.subr.mxu0 0.0
    %402 = vmatpush2.msra.mxu0 0.0
    %403 = vmatprep.subr.mxu0 0.0
    %404 = vmatpush2.msra.mxu0 0.0
    %405 = vmatprep.subr.mxu0 0.0
    %406 = vmatpush2.msra.mxu0 0.0
    %407 = vmatprep.subr.mxu0 0.0
    %408 = vmatpush2.msra.mxu0 0.0
    %409 = vmatprep.subr.mxu0 0.0
    %410 = vmatpush2.msra.mxu0 0.0
    %411 = vmatprep.subr.mxu0 0.0
    %412 = vmatpush2.msra.mxu0 0.0
    %413 = vmatprep.subr.mxu0 0.0
    %414 = vmatpush2.msra.mxu0 0.0
    %415 = vmatprep.subr.mxu0 0.0
    %416 = vmatpush2.msra.mxu0 0.0
    %417 = vmatprep.mubr.f32.mxu0 0.0
    %418 = vmatmul.mubr.f32.gmra.mxu0 %v352
    %v419 = vpop.f32.mrf.mxu0
    %v420 = vadd.f32 0.0, %v419
    %v421 = vpop.f32.mrf.mxu0
    %422 = vdwg.mxu0
    %v423 = vadd.f32 %v232, %v420
    %v424 = vtanh.pop %v423
    %425 = vmatprep.subr.mxu0 0.0
    %426 = vmatpush1.msra.mxu0 %v280
    %427 = vmatprep.subr.mxu0 0.0
    %428 = vmatpush1.msra.mxu0 %v279
    %429 = vmatprep.subr.mxu0 0.0
    %430 = vmatpush1.msra.mxu0 %v278
    %431 = vmatprep.subr.mxu0 0.0
    %432 = vmatpush1.msra.mxu0 %v277
    %433 = vmatprep.subr.mxu0 0.0
    %434 = vmatpush1.msra.mxu0 %v276
    %435 = vmatprep.subr.mxu0 0.0
    %436 = vmatpush1.msra.mxu0 %v275
    %437 = vmatprep.subr.mxu0 0.0
    %438 = vmatpush1.msra.mxu0 %v274
    %439 = vmatprep.subr.mxu0 0.0
    %440 = vmatpush1.msra.mxu0 %v273
    %441 = vmatprep.subr.mxu0 0.0
    %442 = vmatpush1.msra.mxu0 %v272
    %443 = vmatprep.subr.mxu0 0.0
    %444 = vmatpush1.msra.mxu0 %v271
    %445 = vmatprep.subr.mxu0 0.0
    %446 = vmatpush1.msra.mxu0 %v270
    %447 = vmatprep.subr.mxu0 0.0
    %448 = vmatpush1.msra.mxu0 %v269
    %449 = vmatprep.subr.mxu0 0.0
    %450 = vmatpush1.msra.mxu0 %v268
    %451 = vmatprep.subr.mxu0 0.0
    %452 = vmatpush1.msra.mxu0 %v267
    %453 = vmatprep.subr.mxu0 0.0
    %454 = vmatpush1.msra.mxu0 %v266
    %455 = vmatprep.subr.mxu0 0.0
    %456 = vmatpush1.msra.mxu0 %v265
    %457 = vmatprep.subr.mxu0 0.0
    %458 = vmatpush2.msra.mxu0 0.0
    %459 = vmatprep.subr.mxu0 0.0
    %460 = vmatpush2.msra.mxu0 0.0
    %461 = vmatprep.subr.mxu0 0.0
    %462 = vmatpush2.msra.mxu0 0.0
    %463 = vmatprep.subr.mxu0 0.0
    %464 = vmatpush2.msra.mxu0 0.0
    %465 = vmatprep.subr.mxu0 0.0
    %466 = vmatpush2.msra.mxu0 0.0
    %467 = vmatprep.subr.mxu0 0.0
    %468 = vmatpush2.msra.mxu0 0.0
    %469 = vmatprep.subr.mxu0 0.0
    %470 = vmatpush2.msra.mxu0 0.0
    %471 = vmatprep.subr.mxu0 0.0
    %472 = vmatpush2.msra.mxu0 0.0
    %473 = vmatprep.subr.mxu0 0.0
    %474 = vmatpush2.msra.mxu0 0.0
    %475 = vmatprep.subr.mxu0 0.0
    %476 = vmatpush2.msra.mxu0 0.0
    %477 = vmatprep.subr.mxu0 0.0
    %478 = vmatpush2.msra.mxu0 0.0
    %479 = vmatprep.subr.mxu0 0.0
    %480 = vmatpush2.msra.mxu0 0.0
    %481 = vmatprep.subr.mxu0 0.0
    %482 = vmatpush2.msra.mxu0 0.0
    %483 = vmatprep.subr.mxu0 0.0
    %484 = vmatpush2.msra.mxu0 0.0
    %485 = vmatprep.subr.mxu0 0.0
    %486 = vmatpush2.msra.mxu0 0.0
    %487 = vmatprep.subr.mxu0 0.0
    %488 = vmatpush2.msra.mxu0 0.0
    %489 = vmatprep.mubr.f32.mxu0 0.0
    %490 = vmatmul.mubr.f32.gmra.mxu0 %v424
    %v491 = vpop.f32.mrf.mxu0
    %v492 = vadd.f32 0.0, %v491
    %v493 = vpop.f32.mrf.mxu0
    %494 = vdwg.mxu0
    %v495 = vadd.f32 %v237, %v492
    %v496 = vtanh.pop %v495
    %497 = vmatprep.subr.mxu0 0.0
    %498 = vmatpush1.msra.mxu0 %v280
    %499 = vmatprep.subr.mxu0 0.0
    %500 = vmatpush1.msra.mxu0 %v279
    %501 = vmatprep.subr.mxu0 0.0
    %502 = vmatpush1.msra.mxu0 %v278
    %503 = vmatprep.subr.mxu0 0.0
    %504 = vmatpush1.msra.mxu0 %v277
    %505 = vmatprep.subr.mxu0 0.0
    %506 = vmatpush1.msra.mxu0 %v276
    %507 = vmatprep.subr.mxu0 0.0
    %508 = vmatpush1.msra.mxu0 %v275
    %509 = vmatprep.subr.mxu0 0.0
    %510 = vmatpush1.msra.mxu0 %v274
    %511 = vmatprep.subr.mxu0 0.0
    %512 = vmatpush1.msra.mxu0 %v273
    %513 = vmatprep.subr.mxu0 0.0
    %514 = vmatpush1.msra.mxu0 %v272
    %515 = vmatprep.subr.mxu0 0.0
    %516 = vmatpush1.msra.mxu0 %v271
    %517 = vmatprep.subr.mxu0 0.0
    %518 = vmatpush1.msra.mxu0 %v270
    %519 = vmatprep.subr.mxu0 0.0
    %520 = vmatpush1.msra.mxu0 %v269
    %521 = vmatprep.subr.mxu0 0.0
    %522 = vmatpush1.msra.mxu0 %v268
    %523 = vmatprep.subr.mxu0 0.0
    %524 = vmatpush1.msra.mxu0 %v267
    %525 = vmatprep.subr.mxu0 0.0
    %526 = vmatpush1.msra.mxu0 %v266
    %527 = vmatprep.subr.mxu0 0.0
    %528 = vmatpush1.msra.mxu0 %v265
    %529 = vmatprep.subr.mxu0 0.0
    %530 = vmatpush2.msra.mxu0 0.0
    %531 = vmatprep.subr.mxu0 0.0
    %532 = vmatpush2.msra.mxu0 0.0
    %533 = vmatprep.subr.mxu0 0.0
    %534 = vmatpush2.msra.mxu0 0.0
    %535 = vmatprep.subr.mxu0 0.0
    %536 = vmatpush2.msra.mxu0 0.0
    %537 = vmatprep.subr.mxu0 0.0
    %538 = vmatpush2.msra.mxu0 0.0
    %539 = vmatprep.subr.mxu0 0.0
    %540 = vmatpush2.msra.mxu0 0.0
    %541 = vmatprep.subr.mxu0 0.0
    %542 = vmatpush2.msra.mxu0 0.0
    %543 = vmatprep.subr.mxu0 0.0
    %544 = vmatpush2.msra.mxu0 0.0
    %545 = vmatprep.subr.mxu0 0.0
    %546 = vmatpush2.msra.mxu0 0.0
    %547 = vmatprep.subr.mxu0 0.0
    %548 = vmatpush2.msra.mxu0 0.0
    %549 = vmatprep.subr.mxu0 0.0
    %550 = vmatpush2.msra.mxu0 0.0
    %551 = vmatprep.subr.mxu0 0.0
    %552 = vmatpush2.msra.mxu0 0.0
    %553 = vmatprep.subr.mxu0 0.0
    %554 = vmatpush2.msra.mxu0 0.0
    %555 = vmatprep.subr.mxu0 0.0
    %556 = vmatpush2.msra.mxu0 0.0
    %557 = vmatprep.subr.mxu0 0.0
    %558 = vmatpush2.msra.mxu0 0.0
    %559 = vmatprep.subr.mxu0 0.0
    %560 = vmatpush2.msra.mxu0 0.0
    %561 = vmatprep.mubr.f32.mxu0 0.0
    %562 = vmatmul.mubr.f32.gmra.mxu0 %v496
    %v563 = vpop.f32.mrf.mxu0
    %v564 = vadd.f32 0.0, %v563
    %v565 = vpop.f32.mrf.mxu0
    %566 = vdwg.mxu0
    %v567 = vadd.f32 %v242, %v564
    %v568 = vtanh.pop %v567
    %569 = vmatprep.subr.mxu0 0.0
    %570 = vmatpush1.msra.mxu0 %v280
    %571 = vmatprep.subr.mxu0 0.0
    %572 = vmatpush1.msra.mxu0 %v279
    %573 = vmatprep.subr.mxu0 0.0
    %574 = vmatpush1.msra.mxu0 %v278
    %575 = vmatprep.subr.mxu0 0.0
    %576 = vmatpush1.msra.mxu0 %v277
    %577 = vmatprep.subr.mxu0 0.0
    %578 = vmatpush1.msra.mxu0 %v276
    %579 = vmatprep.subr.mxu0 0.0
    %580 = vmatpush1.msra.mxu0 %v275
    %581 = vmatprep.subr.mxu0 0.0
    %582 = vmatpush1.msra.mxu0 %v274
    %583 = vmatprep.subr.mxu0 0.0
    %584 = vmatpush1.msra.mxu0 %v273
    %585 = vmatprep.subr.mxu0 0.0
    %586 = vmatpush1.msra.mxu0 %v272
    %587 = vmatprep.subr.mxu0 0.0
    %588 = vmatpush1.msra.mxu0 %v271
    %589 = vmatprep.subr.mxu0 0.0
    %590 = vmatpush1.msra.mxu0 %v270
    %591 = vmatprep.subr.mxu0 0.0
    %592 = vmatpush1.msra.mxu0 %v269
    %593 = vmatprep.subr.mxu0 0.0
    %594 = vmatpush1.msra.mxu0 %v268
    %595 = vmatprep.subr.mxu0 0.0
    %596 = vmatpush1.msra.mxu0 %v267
    %597 = vmatprep.subr.mxu0 0.0
    %598 = vmatpush1.msra.mxu0 %v266
    %599 = vmatprep.subr.mxu0 0.0
    %600 = vmatpush1.msra.mxu0 %v265
    %601 = vmatprep.subr.mxu0 0.0
    %602 = vmatpush2.msra.mxu0 0.0
    %603 = vmatprep.subr.mxu0 0.0
    %604 = vmatpush2.msra.mxu0 0.0
    %605 = vmatprep.subr.mxu0 0.0
    %606 = vmatpush2.msra.mxu0 0.0
    %607 = vmatprep.subr.mxu0 0.0
    %608 = vmatpush2.msra.mxu0 0.0
    %609 = vmatprep.subr.mxu0 0.0
    %610 = vmatpush2.msra.mxu0 0.0
    %611 = vmatprep.subr.mxu0 0.0
    %612 = vmatpush2.msra.mxu0 0.0
    %613 = vmatprep.subr.mxu0 0.0
    %614 = vmatpush2.msra.mxu0 0.0
    %615 = vmatprep.subr.mxu0 0.0
    %616 = vmatpush2.msra.mxu0 0.0
    %617 = vmatprep.subr.mxu0 0.0
    %618 = vmatpush2.msra.mxu0 0.0
    %619 = vmatprep.subr.mxu0 0.0
    %620 = vmatpush2.msra.mxu0 0.0
    %621 = vmatprep.subr.mxu0 0.0
    %622 = vmatpush2.msra.mxu0 0.0
    %623 = vmatprep.subr.mxu0 0.0
    %624 = vmatpush2.msra.mxu0 0.0
    %625 = vmatprep.subr.mxu0 0.0
    %626 = vmatpush2.msra.mxu0 0.0
    %627 = vmatprep.subr.mxu0 0.0
    %628 = vmatpush2.msra.mxu0 0.0
    %629 = vmatprep.subr.mxu0 0.0
    %630 = vmatpush2.msra.mxu0 0.0
    %631 = vmatprep.subr.mxu0 0.0
    %632 = vmatpush2.msra.mxu0 0.0
    %633 = vmatprep.mubr.f32.mxu0 0.0
    %634 = vmatmul.mubr.f32.gmra.mxu0 %v568
    %v635 = vpop.f32.mrf.mxu0
    %v636 = vadd.f32 0.0, %v635
    %v637 = vpop.f32.mrf.mxu0
    %638 = vdwg.mxu0
    %v639 = vadd.f32 %v247, %v636
    %v640 = vtanh.pop %v639
    %641 = vmatprep.subr.mxu0 0.0
    %642 = vmatpush1.msra.mxu0 %v280
    %643 = vmatprep.subr.mxu0 0.0
    %644 = vmatpush1.msra.mxu0 %v279
    %645 = vmatprep.subr.mxu0 0.0
    %646 = vmatpush1.msra.mxu0 %v278
    %647 = vmatprep.subr.mxu0 0.0
    %648 = vmatpush1.msra.mxu0 %v277
    %649 = vmatprep.subr.mxu0 0.0
    %650 = vmatpush1.msra.mxu0 %v276
    %651 = vmatprep.subr.mxu0 0.0
    %652 = vmatpush1.msra.mxu0 %v275
    %653 = vmatprep.subr.mxu0 0.0
    %654 = vmatpush1.msra.mxu0 %v274
    %655 = vmatprep.subr.mxu0 0.0
    %656 = vmatpush1.msra.mxu0 %v273
    %657 = vmatprep.subr.mxu0 0.0
    %658 = vmatpush1.msra.mxu0 %v272
    %659 = vmatprep.subr.mxu0 0.0
    %660 = vmatpush1.msra.mxu0 %v271
    %661 = vmatprep.subr.mxu0 0.0
    %662 = vmatpush1.msra.mxu0 %v270
    %663 = vmatprep.subr.mxu0 0.0
    %664 = vmatpush1.msra.mxu0 %v269
    %665 = vmatprep.subr.mxu0 0.0
    %666 = vmatpush1.msra.mxu0 %v268
    %667 = vmatprep.subr.mxu0 0.0
    %668 = vmatpush1.msra.mxu0 %v267
    %669 = vmatprep.subr.mxu0 0.0
    %670 = vmatpush1.msra.mxu0 %v266
    %671 = vmatprep.subr.mxu0 0.0
    %672 = vmatpush1.msra.mxu0 %v265
    %673 = vmatprep.subr.mxu0 0.0
    %674 = vmatpush2.msra.mxu0 0.0
    %675 = vmatprep.subr.mxu0 0.0
    %676 = vmatpush2.msra.mxu0 0.0
    %677 = vmatprep.subr.mxu0 0.0
    %678 = vmatpush2.msra.mxu0 0.0
    %679 = vmatprep.subr.mxu0 0.0
    %680 = vmatpush2.msra.mxu0 0.0
    %681 = vmatprep.subr.mxu0 0.0
    %682 = vmatpush2.msra.mxu0 0.0
    %683 = vmatprep.subr.mxu0 0.0
    %684 = vmatpush2.msra.mxu0 0.0
    %685 = vmatprep.subr.mxu0 0.0
    %686 = vmatpush2.msra.mxu0 0.0
    %687 = vmatprep.subr.mxu0 0.0
    %688 = vmatpush2.msra.mxu0 0.0
    %689 = vmatprep.subr.mxu0 0.0
    %690 = vmatpush2.msra.mxu0 0.0
    %691 = vmatprep.subr.mxu0 0.0
    %692 = vmatpush2.msra.mxu0 0.0
    %693 = vmatprep.subr.mxu0 0.0
    %694 = vmatpush2.msra.mxu0 0.0
    %695 = vmatprep.subr.mxu0 0.0
    %696 = vmatpush2.msra.mxu0 0.0
    %697 = vmatprep.subr.mxu0 0.0
    %698 = vmatpush2.msra.mxu0 0.0
    %699 = vmatprep.subr.mxu0 0.0
    %700 = vmatpush2.msra.mxu0 0.0
    %701 = vmatprep.subr.mxu0 0.0
    %702 = vmatpush2.msra.mxu0 0.0
    %703 = vmatprep.subr.mxu0 0.0
    %704 = vmatpush2.msra.mxu0 0.0
    %705 = vmatprep.mubr.f32.mxu0 0.0
    %706 = vmatmul.mubr.f32.gmra.mxu0 %v640
    %v707 = vpop.f32.mrf.mxu0
    %v708 = vadd.f32 0.0, %v707
    %v709 = vpop.f32.mrf.mxu0
    %710 = vdwg.mxu0
    %v711 = vadd.f32 %v252, %v708
    %v712 = vtanh.pop %v711
    %713 = vmatprep.subr.mxu0 0.0
    %714 = vmatpush1.msra.mxu0 %v280
    %715 = vmatprep.subr.mxu0 0.0
    %716 = vmatpush1.msra.mxu0 %v279
    %717 = vmatprep.subr.mxu0 0.0
    %718 = vmatpush1.msra.mxu0 %v278
    %719 = vmatprep.subr.mxu0 0.0
    %720 = vmatpush1.msra.mxu0 %v277
    %721 = vmatprep.subr.mxu0 0.0
    %722 = vmatpush1.msra.mxu0 %v276
    %723 = vmatprep.subr.mxu0 0.0
    %724 = vmatpush1.msra.mxu0 %v275
    %725 = vmatprep.subr.mxu0 0.0
    %726 = vmatpush1.msra.mxu0 %v274
    %727 = vmatprep.subr.mxu0 0.0
    %728 = vmatpush1.msra.mxu0 %v273
    %729 = vmatprep.subr.mxu0 0.0
    %730 = vmatpush1.msra.mxu0 %v272
    %731 = vmatprep.subr.mxu0 0.0
    %732 = vmatpush1.msra.mxu0 %v271
    %733 = vmatprep.subr.mxu0 0.0
    %734 = vmatpush1.msra.mxu0 %v270
    %735 = vmatprep.subr.mxu0 0.0
    %736 = vmatpush1.msra.mxu0 %v269
    %737 = vmatprep.subr.mxu0 0.0
    %738 = vmatpush1.msra.mxu0 %v268
    %739 = vmatprep.subr.mxu0 0.0
    %740 = vmatpush1.msra.mxu0 %v267
    %741 = vmatprep.subr.mxu0 0.0
    %742 = vmatpush1.msra.mxu0 %v266
    %743 = vmatprep.subr.mxu0 0.0
    %744 = vmatpush1.msra.mxu0 %v265
    %745 = vmatprep.subr.mxu0 0.0
    %746 = vmatpush2.msra.mxu0 0.0
    %747 = vmatprep.subr.mxu0 0.0
    %748 = vmatpush2.msra.mxu0 0.0
    %749 = vmatprep.subr.mxu0 0.0
    %750 = vmatpush2.msra.mxu0 0.0
    %751 = vmatprep.subr.mxu0 0.0
    %752 = vmatpush2.msra.mxu0 0.0
    %753 = vmatprep.subr.mxu0 0.0
    %754 = vmatpush2.msra.mxu0 0.0
    %755 = vmatprep.subr.mxu0 0.0
    %756 = vmatpush2.msra.mxu0 0.0
    %757 = vmatprep.subr.mxu0 0.0
    %758 = vmatpush2.msra.mxu0 0.0
    %759 = vmatprep.subr.mxu0 0.0
    %760 = vmatpush2.msra.mxu0 0.0
    %761 = vmatprep.subr.mxu0 0.0
    %762 = vmatpush2.msra.mxu0 0.0
    %763 = vmatprep.subr.mxu0 0.0
    %764 = vmatpush2.msra.mxu0 0.0
    %765 = vmatprep.subr.mxu0 0.0
    %766 = vmatpush2.msra.mxu0 0.0
    %767 = vmatprep.subr.mxu0 0.0
    %768 = vmatpush2.msra.mxu0 0.0
    %769 = vmatprep.subr.mxu0 0.0
    %770 = vmatpush2.msra.mxu0 0.0
    %771 = vmatprep.subr.mxu0 0.0
    %772 = vmatpush2.msra.mxu0 0.0
    %773 = vmatprep.subr.mxu0 0.0
    %774 = vmatpush2.msra.mxu0 0.0
    %775 = vmatprep.subr.mxu0 0.0
    %776 = vmatpush2.msra.mxu0 0.0
    %777 = vmatprep.mubr.f32.mxu0 0.0
    %778 = vmatmul.mubr.f32.gmra.mxu0 %v712
    %v779 = vpop.f32.mrf.mxu0
    %v780 = vadd.f32 0.0, %v779
    %v781 = vpop.f32.mrf.mxu0
    %782 = vdwg.mxu0
    %v783 = vadd.f32 %v257, %v780
    %v784 = vtanh.pop %v783
    %785 = vmatprep.subr.mxu0 0.0
    %786 = vmatpush1.msra.mxu0 %v280
    %787 = vmatprep.subr.mxu0 0.0
    %788 = vmatpush1.msra.mxu0 %v279
    %789 = vmatprep.subr.mxu0 0.0
    %790 = vmatpush1.msra.mxu0 %v278
    %791 = vmatprep.subr.mxu0 0.0
    %792 = vmatpush1.msra.mxu0 %v277
    %793 = vmatprep.subr.mxu0 0.0
    %794 = vmatpush1.msra.mxu0 %v276
    %795 = vmatprep.subr.mxu0 0.0
    %796 = vmatpush1.msra.mxu0 %v275
    %797 = vmatprep.subr.mxu0 0.0
    %798 = vmatpush1.msra.mxu0 %v274
    %799 = vmatprep.subr.mxu0 0.0
    %800 = vmatpush1.msra.mxu0 %v273
    %801 = vmatprep.subr.mxu0 0.0
    %802 = vmatpush1.msra.mxu0 %v272
    %803 = vmatprep.subr.mxu0 0.0
    %804 = vmatpush1.msra.mxu0 %v271
    %805 = vmatprep.subr.mxu0 0.0
    %806 = vmatpush1.msra.mxu0 %v270
    %807 = vmatprep.subr.mxu0 0.0
    %808 = vmatpush1.msra.mxu0 %v269
    %809 = vmatprep.subr.mxu0 0.0
    %810 = vmatpush1.msra.mxu0 %v268
    %811 = vmatprep.subr.mxu0 0.0
    %812 = vmatpush1.msra.mxu0 %v267
    %813 = vmatprep.subr.mxu0 0.0
    %814 = vmatpush1.msra.mxu0 %v266
    %815 = vmatprep.subr.mxu0 0.0
    %816 = vmatpush1.msra.mxu0 %v265
    %817 = vmatprep.subr.mxu0 0.0
    %818 = vmatpush2.msra.mxu0 0.0
    %819 = vmatprep.subr.mxu0 0.0
    %820 = vmatpush2.msra.mxu0 0.0
    %821 = vmatprep.subr.mxu0 0.0
    %822 = vmatpush2.msra.mxu0 0.0
    %823 = vmatprep.subr.mxu0 0.0
    %824 = vmatpush2.msra.mxu0 0.0
    %825 = vmatprep.subr.mxu0 0.0
    %826 = vmatpush2.msra.mxu0 0.0
    %827 = vmatprep.subr.mxu0 0.0
    %828 = vmatpush2.msra.mxu0 0.0
    %829 = vmatprep.subr.mxu0 0.0
    %830 = vmatpush2.msra.mxu0 0.0
    %831 = vmatprep.subr.mxu0 0.0
    %832 = vmatpush2.msra.mxu0 0.0
    %833 = vmatprep.subr.mxu0 0.0
    %834 = vmatpush2.msra.mxu0 0.0
    %835 = vmatprep.subr.mxu0 0.0
    %836 = vmatpush2.msra.mxu0 0.0
    %837 = vmatprep.subr.mxu0 0.0
    %838 = vmatpush2.msra.mxu0 0.0
    %839 = vmatprep.subr.mxu0 0.0
    %840 = vmatpush2.msra.mxu0 0.0
    %841 = vmatprep.subr.mxu0 0.0
    %842 = vmatpush2.msra.mxu0 0.0
    %843 = vmatprep.subr.mxu0 0.0
    %844 = vmatpush2.msra.mxu0 0.0
    %845 = vmatprep.subr.mxu0 0.0
    %846 = vmatpush2.msra.mxu0 0.0
    %847 = vmatprep.subr.mxu0 0.0
    %848 = vmatpush2.msra.mxu0 0.0
    %849 = vmatprep.mubr.f32.mxu0 0.0
    %850 = vmatmul.mubr.f32.gmra.mxu0 %v784
    %v851 = vpop.f32.mrf.mxu0
    %v852 = vadd.f32 0.0, %v851
    %v853 = vpop.f32.mrf.mxu0
    %854 = vdwg.mxu0
    %v855 = vadd.f32 %v262, %v852
    %v856 = vtanh.pop %v855
    %v857 = vld [vmem:[#allocation8] sm:$0xff]
    %v858 = vld [vmem:[#allocation8 + $0x8] sm:$0xff]
    %v859 = vld [vmem:[#allocation8 + $0x10] sm:$0xff]
    %v860 = vld [vmem:[#allocation8 + $0x18] sm:$0xff]
    %v861 = vld [vmem:[#allocation8 + $0x20] sm:$0xff]
    %v862 = vld [vmem:[#allocation8 + $0x28] sm:$0xff]
    %v863 = vld [vmem:[#allocation8 + $0x30] sm:$0xff]
    %v864 = vld [vmem:[#allocation8 + $0x38] sm:$0xff]
    %v865 = vld [vmem:[#allocation8 + $0x40] sm:$0xff]
    %v866 = vld [vmem:[#allocation8 + $0x48] sm:$0xff]
    %v867 = vld [vmem:[#allocation8 + $0x50] sm:$0xff]
    %v868 = vld [vmem:[#allocation8 + $0x58] sm:$0xff]
    %v869 = vld [vmem:[#allocation8 + $0x60] sm:$0xff]
    %v870 = vld [vmem:[#allocation8 + $0x68] sm:$0xff]
    %v871 = vld [vmem:[#allocation8 + $0x70] sm:$0xff]
    %v872 = vld [vmem:[#allocation8 + $0x78] sm:$0xff]
    %v873 = vld [vmem:[%s5] sm:$0x1]
    %v875 = vlaneseq
    %v876 = vshrl.u32 %v875, 7
    %v877 = vsub.s32 0, %v876
    %v878 = vrot.slane %v873, %v877
    %880 = vmatprep.subr.mxu0 0.0
    %881 = vmatpush1.msra.mxu0 %v872
    %882 = vmatprep.subr.mxu0 0.0
    %883 = vmatpush1.msra.mxu0 %v871
    %884 = vmatprep.subr.mxu0 0.0
    %885 = vmatpush1.msra.mxu0 %v870
    %886 = vmatprep.subr.mxu0 0.0
    %887 = vmatpush1.msra.mxu0 %v869
    %888 = vmatprep.subr.mxu0 0.0
    %889 = vmatpush1.msra.mxu0 %v868
    %890 = vmatprep.subr.mxu0 0.0
    %891 = vmatpush1.msra.mxu0 %v867
    %892 = vmatprep.subr.mxu0 0.0
    %893 = vmatpush1.msra.mxu0 %v866
    %894 = vmatprep.subr.mxu0 0.0
    %895 = vmatpush1.msra.mxu0 %v865
    %896 = vmatprep.subr.mxu0 0.0
    %897 = vmatpush1.msra.mxu0 %v864
    %898 = vmatprep.subr.mxu0 0.0
    %899 = vmatpush1.msra.mxu0 %v863
    %900 = vmatprep.subr.mxu0 0.0
    %901 = vmatpush1.msra.mxu0 %v862
    %902 = vmatprep.subr.mxu0 0.0
    %903 = vmatpush1.msra.mxu0 %v861
    %904 = vmatprep.subr.mxu0 0.0
    %905 = vmatpush1.msra.mxu0 %v860
    %906 = vmatprep.subr.mxu0 0.0
    %907 = vmatpush1.msra.mxu0 %v859
    %908 = vmatprep.subr.mxu0 0.0
    %909 = vmatpush1.msra.mxu0 %v858
    %910 = vmatprep.subr.mxu0 0.0
    %911 = vmatpush1.msra.mxu0 %v857
    %912 = vmatprep.subr.mxu0 0.0
    %913 = vmatpush2.msra.mxu0 0.0
    %914 = vmatprep.subr.mxu0 0.0
    %915 = vmatpush2.msra.mxu0 0.0
    %916 = vmatprep.subr.mxu0 0.0
    %917 = vmatpush2.msra.mxu0 0.0
    %918 = vmatprep.subr.mxu0 0.0
    %919 = vmatpush2.msra.mxu0 0.0
    %920 = vmatprep.subr.mxu0 0.0
    %921 = vmatpush2.msra.mxu0 0.0
    %922 = vmatprep.subr.mxu0 0.0
    %923 = vmatpush2.msra.mxu0 0.0
    %924 = vmatprep.subr.mxu0 0.0
    %925 = vmatpush2.msra.mxu0 0.0
    %926 = vmatprep.subr.mxu0 0.0
    %927 = vmatpush2.msra.mxu0 0.0
    %928 = vmatprep.subr.mxu0 0.0
    %929 = vmatpush2.msra.mxu0 0.0
    %930 = vmatprep.subr.mxu0 0.0
    %931 = vmatpush2.msra.mxu0 0.0
    %932 = vmatprep.subr.mxu0 0.0
    %933 = vmatpush2.msra.mxu0 0.0
    %934 = vmatprep.subr.mxu0 0.0
    %935 = vmatpush2.msra.mxu0 0.0
    %936 = vmatprep.subr.mxu0 0.0
    %937 = vmatpush2.msra.mxu0 0.0
    %938 = vmatprep.subr.mxu0 0.0
    %939 = vmatpush2.msra.mxu0 0.0
    %940 = vmatprep.subr.mxu0 0.0
    %941 = vmatpush2.msra.mxu0 0.0
    %942 = vmatprep.subr.mxu0 0.0
    %943 = vmatpush2.msra.mxu0 0.0
    %944 = vmatprep.mubr.f32.mxu0 0.0
    %945 = vmatmul.mubr.f32.gmra.mxu0 %v352
    %v946 = vpop.f32.mrf.mxu0
    %v947 = vadd.f32 %v878, %v946
    %v948 = vpop.f32.mrf.mxu0
    %949 = vmatprep.mubr.f32.mxu0 0.0
    %950 = vmatmul.mubr.f32.gmra.mxu0 %v424
    %v951 = vpop.f32.mrf.mxu0
    %v952 = vadd.f32 %v878, %v951
    %v953 = vpop.f32.mrf.mxu0
    %954 = vmatprep.mubr.f32.mxu0 0.0
    %955 = vmatmul.mubr.f32.gmra.mxu0 %v496
    %v956 = vpop.f32.mrf.mxu0
    %v957 = vadd.f32 %v878, %v956
    %v958 = vpop.f32.mrf.mxu0
    %959 = vmatprep.mubr.f32.mxu0 0.0
    %960 = vmatmul.mubr.f32.gmra.mxu0 %v568
    %v961 = vpop.f32.mrf.mxu0
    %v962 = vadd.f32 %v878, %v961
    %v963 = vpop.f32.mrf.mxu0
    %964 = vmatprep.mubr.f32.mxu0 0.0
    %965 = vmatmul.mubr.f32.gmra.mxu0 %v640
    %v966 = vpop.f32.mrf.mxu0
    %v967 = vadd.f32 %v878, %v966
    %v968 = vpop.f32.mrf.mxu0
    %969 = vmatprep.mubr.f32.mxu0 0.0
    %970 = vmatmul.mubr.f32.gmra.mxu0 %v712
    %v971 = vpop.f32.mrf.mxu0
    %v972 = vadd.f32 %v878, %v971
    %v973 = vpop.f32.mrf.mxu0
    %974 = vmatprep.mubr.f32.mxu0 0.0
    %975 = vmatmul.mubr.f32.gmra.mxu0 %v784
    %v976 = vpop.f32.mrf.mxu0
    %v977 = vadd.f32 %v878, %v976
    %v978 = vpop.f32.mrf.mxu0
    %979 = vmatprep.mubr.f32.mxu0 0.0
    %980 = vmatmul.mubr.f32.gmra.mxu0 %v856
    %v981 = vpop.f32.mrf.mxu0
    %v982 = vadd.f32 %v878, %v981
    %v983 = vpop.f32.mrf.mxu0
    %984 = vdwg.mxu0
    %v985 = vmax.f32 %v947, 0.0
    %v986 = vmax.f32 %v952, 0.0
    %v987 = vmax.f32 %v957, 0.0
    %v988 = vmax.f32 %v962, 0.0
    %v989 = vmax.f32 %v967, 0.0
    %v990 = vmax.f32 %v972, 0.0
    %v991 = vmax.f32 %v977, 0.0
    %v992 = vmax.f32 %v982, 0.0
    %v993 = vld [vmem:[#allocation10] sm:$0xff]
    %v994 = vld [vmem:[#allocation10 + $0x8] sm:$0xff]
    %v995 = vld [vmem:[#allocation10 + $0x10] sm:$0xff]
    %v996 = vld [vmem:[#allocation10 + $0x18] sm:$0xff]
    %v997 = vld [vmem:[#allocation10 + $0x20] sm:$0xff]
    %v998 = vld [vmem:[#allocation10 + $0x28] sm:$0xff]
    %v999 = vld [vmem:[#allocation10 + $0x30] sm:$0xff]
    %v1000 = vld [vmem:[#allocation10 + $0x38] sm:$0xff]
    %v1001 = vld [vmem:[#allocation10 + $0x40] sm:$0xff]
    %v1002 = vld [vmem:[#allocation10 + $0x48] sm:$0xff]
    %v1003 = vld [vmem:[#allocation10 + $0x50] sm:$0xff]
    %v1004 = vld [vmem:[#allocation10 + $0x58] sm:$0xff]
    %v1005 = vld [vmem:[#allocation10 + $0x60] sm:$0xff]
    %v1006 = vld [vmem:[#allocation10 + $0x68] sm:$0xff]
    %v1007 = vld [vmem:[#allocation10 + $0x70] sm:$0xff]
    %v1008 = vld [vmem:[#allocation10 + $0x78] sm:$0xff]
    %v1009 = vld [vmem:[%s7] sm:$0x1]
    %v1011 = vlaneseq
    %v1012 = vshrl.u32 %v1011, 7
    %v1013 = vsub.s32 0, %v1012
    %v1014 = vrot.slane %v1009, %v1013
    %1016 = vmatprep.subr.mxu0 0.0
    %1017 = vmatpush1.msra.mxu0 %v1008
    %1018 = vmatprep.subr.mxu0 0.0
    %1019 = vmatpush1.msra.mxu0 %v1007
    %1020 = vmatprep.subr.mxu0 0.0
    %1021 = vmatpush1.msra.mxu0 %v1006
    %1022 = vmatprep.subr.mxu0 0.0
    %1023 = vmatpush1.msra.mxu0 %v1005
    %1024 = vmatprep.subr.mxu0 0.0
    %1025 = vmatpush1.msra.mxu0 %v1004
    %1026 = vmatprep.subr.mxu0 0.0
    %1027 = vmatpush1.msra.mxu0 %v1003
    %1028 = vmatprep.subr.mxu0 0.0
    %1029 = vmatpush1.msra.mxu0 %v1002
    %1030 = vmatprep.subr.mxu0 0.0
    %1031 = vmatpush1.msra.mxu0 %v1001
    %1032 = vmatprep.subr.mxu0 0.0
    %1033 = vmatpush1.msra.mxu0 %v1000
    %1034 = vmatprep.subr.mxu0 0.0
    %1035 = vmatpush1.msra.mxu0 %v999
    %1036 = vmatprep.subr.mxu0 0.0
    %1037 = vmatpush1.msra.mxu0 %v998
    %1038 = vmatprep.subr.mxu0 0.0
    %1039 = vmatpush1.msra.mxu0 %v997
    %1040 = vmatprep.subr.mxu0 0.0
    %1041 = vmatpush1.msra.mxu0 %v996
    %1042 = vmatprep.subr.mxu0 0.0
    %1043 = vmatpush1.msra.mxu0 %v995
    %1044 = vmatprep.subr.mxu0 0.0
    %1045 = vmatpush1.msra.mxu0 %v994
    %1046 = vmatprep.subr.mxu0 0.0
    %1047 = vmatpush1.msra.mxu0 %v993
    %1048 = vmatprep.subr.mxu0 0.0
    %1049 = vmatpush2.msra.mxu0 0.0
    %1050 = vmatprep.subr.mxu0 0.0
    %1051 = vmatpush2.msra.mxu0 0.0
    %1052 = vmatprep.subr.mxu0 0.0
    %1053 = vmatpush2.msra.mxu0 0.0
    %1054 = vmatprep.subr.mxu0 0.0
    %1055 = vmatpush2.msra.mxu0 0.0
    %1056 = vmatprep.subr.mxu0 0.0
    %1057 = vmatpush2.msra.mxu0 0.0
    %1058 = vmatprep.subr.mxu0 0.0
    %1059 = vmatpush2.msra.mxu0 0.0
    %1060 = vmatprep.subr.mxu0 0.0
    %1061 = vmatpush2.msra.mxu0 0.0
    %1062 = vmatprep.subr.mxu0 0.0
    %1063 = vmatpush2.msra.mxu0 0.0
    %1064 = vmatprep.subr.mxu0 0.0
    %1065 = vmatpush2.msra.mxu0 0.0
    %1066 = vmatprep.subr.mxu0 0.0
    %1067 = vmatpush2.msra.mxu0 0.0
    %1068 = vmatprep.subr.mxu0 0.0
    %1069 = vmatpush2.msra.mxu0 0.0
    %1070 = vmatprep.subr.mxu0 0.0
    %1071 = vmatpush2.msra.mxu0 0.0
    %1072 = vmatprep.subr.mxu0 0.0
    %1073 = vmatpush2.msra.mxu0 0.0
    %1074 = vmatprep.subr.mxu0 0.0
    %1075 = vmatpush2.msra.mxu0 0.0
    %1076 = vmatprep.subr.mxu0 0.0
    %1077 = vmatpush2.msra.mxu0 0.0
    %1078 = vmatprep.subr.mxu0 0.0
    %1079 = vmatpush2.msra.mxu0 0.0
    %1080 = vmatprep.mubr.f32.mxu0 0.0
    %1081 = vmatmul.mubr.f32.gmra.mxu0 %v985
    %v1082 = vpop.f32.mrf.mxu0
    %v1083 = vadd.f32 %v1014, %v1082
    %v1084 = vpop.f32.mrf.mxu0
    %1085 = vmatprep.mubr.f32.mxu0 0.0
    %1086 = vmatmul.mubr.f32.gmra.mxu0 %v986
    %v1087 = vpop.f32.mrf.mxu0
    %v1088 = vadd.f32 %v1014, %v1087
    %v1089 = vpop.f32.mrf.mxu0
    %1090 = vmatprep.mubr.f32.mxu0 0.0
    %1091 = vmatmul.mubr.f32.gmra.mxu0 %v987
    %v1092 = vpop.f32.mrf.mxu0
    %v1093 = vadd.f32 %v1014, %v1092
    %v1094 = vpop.f32.mrf.mxu0
    %1095 = vmatprep.mubr.f32.mxu0 0.0
    %1096 = vmatmul.mubr.f32.gmra.mxu0 %v988
    %v1097 = vpop.f32.mrf.mxu0
    %v1098 = vadd.f32 %v1014, %v1097
    %v1099 = vpop.f32.mrf.mxu0
    %1100 = vmatprep.mubr.f32.mxu0 0.0
    %1101 = vmatmul.mubr.f32.gmra.mxu0 %v989
    %v1102 = vpop.f32.mrf.mxu0
    %v1103 = vadd.f32 %v1014, %v1102
    %v1104 = vpop.f32.mrf.mxu0
    %1105 = vmatprep.mubr.f32.mxu0 0.0
    %1106 = vmatmul.mubr.f32.gmra.mxu0 %v990
    %v1107 = vpop.f32.mrf.mxu0
    %v1108 = vadd.f32 %v1014, %v1107
    %v1109 = vpop.f32.mrf.mxu0
    %1110 = vmatprep.mubr.f32.mxu0 0.0
    %1111 = vmatmul.mubr.f32.gmra.mxu0 %v991
    %v1112 = vpop.f32.mrf.mxu0
    %v1113 = vadd.f32 %v1014, %v1112
    %v1114 = vpop.f32.mrf.mxu0
    %1115 = vmatprep.mubr.f32.mxu0 0.0
    %1116 = vmatmul.mubr.f32.gmra.mxu0 %v992
    %v1117 = vpop.f32.mrf.mxu0
    %v1118 = vadd.f32 %v1014, %v1117
    %v1119 = vpop.f32.mrf.mxu0
    %1120 = vdwg.mxu0
    %v1121 = vmax.f32 %v1083, 0.0
    %v1122 = vmax.f32 %v1088, 0.0
    %v1123 = vmax.f32 %v1093, 0.0
    %v1124 = vmax.f32 %v1098, 0.0
    %v1125 = vmax.f32 %v1103, 0.0
    %v1126 = vmax.f32 %v1108, 0.0
    %v1127 = vmax.f32 %v1113, 0.0
    %v1128 = vmax.f32 %v1118, 0.0
    %v1129 = vld [vmem:[#allocation11] sm:$0xff]
    %v1130 = vld [vmem:[#allocation11 + $0x8] sm:$0xff]
    %v1131 = vld [vmem:[#allocation11 + $0x10] sm:$0xff]
    %v1132 = vld [vmem:[#allocation11 + $0x18] sm:$0xff]
    %v1133 = vld [vmem:[#allocation11 + $0x20] sm:$0xff]
    %v1134 = vld [vmem:[#allocation11 + $0x28] sm:$0xff]
    %v1135 = vld [vmem:[#allocation11 + $0x30] sm:$0xff]
    %v1136 = vld [vmem:[#allocation11 + $0x38] sm:$0xff]
    %v1137 = vld [vmem:[#allocation11 + $0x40] sm:$0xff]
    %v1138 = vld [vmem:[#allocation11 + $0x48] sm:$0xff]
    %v1139 = vld [vmem:[#allocation11 + $0x50] sm:$0xff]
    %v1140 = vld [vmem:[#allocation11 + $0x58] sm:$0xff]
    %v1141 = vld [vmem:[#allocation11 + $0x60] sm:$0xff]
    %v1142 = vld [vmem:[#allocation11 + $0x68] sm:$0xff]
    %v1143 = vld [vmem:[#allocation11 + $0x70] sm:$0xff]
    %v1144 = vld [vmem:[#allocation11 + $0x78] sm:$0xff]
    %v1145 = vld [vmem:[%s9] sm:$0x1]
    %v1147 = vlaneseq
    %v1148 = vshrl.u32 %v1147, 7
    %v1149 = vsub.s32 0, %v1148
    %v1150 = vrot.slane %v1145, %v1149
    %1152 = vmatprep.subr.mxu0 0.0
    %1153 = vmatpush1.msra.mxu0 %v1144
    %1154 = vmatprep.subr.mxu0 0.0
    %1155 = vmatpush1.msra.mxu0 %v1143
    %1156 = vmatprep.subr.mxu0 0.0
    %1157 = vmatpush1.msra.mxu0 %v1142
    %1158 = vmatprep.subr.mxu0 0.0
    %1159 = vmatpush1.msra.mxu0 %v1141
    %1160 = vmatprep.subr.mxu0 0.0
    %1161 = vmatpush1.msra.mxu0 %v1140
    %1162 = vmatprep.subr.mxu0 0.0
    %1163 = vmatpush1.msra.mxu0 %v1139
    %1164 = vmatprep.subr.mxu0 0.0
    %1165 = vmatpush1.msra.mxu0 %v1138
    %1166 = vmatprep.subr.mxu0 0.0
    %1167 = vmatpush1.msra.mxu0 %v1137
    %1168 = vmatprep.subr.mxu0 0.0
    %1169 = vmatpush1.msra.mxu0 %v1136
    %1170 = vmatprep.subr.mxu0 0.0
    %1171 = vmatpush1.msra.mxu0 %v1135
    %1172 = vmatprep.subr.mxu0 0.0
    %1173 = vmatpush1.msra.mxu0 %v1134
    %1174 = vmatprep.subr.mxu0 0.0
    %1175 = vmatpush1.msra.mxu0 %v1133
    %1176 = vmatprep.subr.mxu0 0.0
    %1177 = vmatpush1.msra.mxu0 %v1132
    %1178 = vmatprep.subr.mxu0 0.0
    %1179 = vmatpush1.msra.mxu0 %v1131
    %1180 = vmatprep.subr.mxu0 0.0
    %1181 = vmatpush1.msra.mxu0 %v1130
    %1182 = vmatprep.subr.mxu0 0.0
    %1183 = vmatpush1.msra.mxu0 %v1129
    %1184 = vmatprep.subr.mxu0 0.0
    %1185 = vmatpush2.msra.mxu0 0.0
    %1186 = vmatprep.subr.mxu0 0.0
    %1187 = vmatpush2.msra.mxu0 0.0
    %1188 = vmatprep.subr.mxu0 0.0
    %1189 = vmatpush2.msra.mxu0 0.0
    %1190 = vmatprep.subr.mxu0 0.0
    %1191 = vmatpush2.msra.mxu0 0.0
    %1192 = vmatprep.subr.mxu0 0.0
    %1193 = vmatpush2.msra.mxu0 0.0
    %1194 = vmatprep.subr.mxu0 0.0
    %1195 = vmatpush2.msra.mxu0 0.0
    %1196 = vmatprep.subr.mxu0 0.0
    %1197 = vmatpush2.msra.mxu0 0.0
    %1198 = vmatprep.subr.mxu0 0.0
    %1199 = vmatpush2.msra.mxu0 0.0
    %1200 = vmatprep.subr.mxu0 0.0
    %1201 = vmatpush2.msra.mxu0 0.0
    %1202 = vmatprep.subr.mxu0 0.0
    %1203 = vmatpush2.msra.mxu0 0.0
    %1204 = vmatprep.subr.mxu0 0.0
    %1205 = vmatpush2.msra.mxu0 0.0
    %1206 = vmatprep.subr.mxu0 0.0
    %1207 = vmatpush2.msra.mxu0 0.0
    %1208 = vmatprep.subr.mxu0 0.0
    %1209 = vmatpush2.msra.mxu0 0.0
    %1210 = vmatprep.subr.mxu0 0.0
    %1211 = vmatpush2.msra.mxu0 0.0
    %1212 = vmatprep.subr.mxu0 0.0
    %1213 = vmatpush2.msra.mxu0 0.0
    %1214 = vmatprep.subr.mxu0 0.0
    %1215 = vmatpush2.msra.mxu0 0.0
    %1216 = vmatprep.mubr.f32.mxu0 0.0
    %1217 = vmatmul.mubr.f32.gmra.mxu0 %v1121
    %v1218 = vpop.f32.mrf.mxu0
    %v1219 = vadd.f32 %v1150, %v1218
    %v1220 = vpop.f32.mrf.mxu0
    %1221 = vmatprep.mubr.f32.mxu0 0.0
    %1222 = vmatmul.mubr.f32.gmra.mxu0 %v1122
    %v1223 = vpop.f32.mrf.mxu0
    %v1224 = vadd.f32 %v1150, %v1223
    %v1225 = vpop.f32.mrf.mxu0
    %1226 = vmatprep.mubr.f32.mxu0 0.0
    %1227 = vmatmul.mubr.f32.gmra.mxu0 %v1123
    %v1228 = vpop.f32.mrf.mxu0
    %v1229 = vadd.f32 %v1150, %v1228
    %v1230 = vpop.f32.mrf.mxu0
    %1231 = vmatprep.mubr.f32.mxu0 0.0
    %1232 = vmatmul.mubr.f32.gmra.mxu0 %v1124
    %v1233 = vpop.f32.mrf.mxu0
    %v1234 = vadd.f32 %v1150, %v1233
    %v1235 = vpop.f32.mrf.mxu0
    %1236 = vmatprep.mubr.f32.mxu0 0.0
    %1237 = vmatmul.mubr.f32.gmra.mxu0 %v1125
    %v1238 = vpop.f32.mrf.mxu0
    %v1239 = vadd.f32 %v1150, %v1238
    %v1240 = vpop.f32.mrf.mxu0
    %1241 = vmatprep.mubr.f32.mxu0 0.0
    %1242 = vmatmul.mubr.f32.gmra.mxu0 %v1126
    %v1243 = vpop.f32.mrf.mxu0
    %v1244 = vadd.f32 %v1150, %v1243
    %v1245 = vpop.f32.mrf.mxu0
    %1246 = vmatprep.mubr.f32.mxu0 0.0
    %1247 = vmatmul.mubr.f32.gmra.mxu0 %v1127
    %v1248 = vpop.f32.mrf.mxu0
    %v1249 = vadd.f32 %v1150, %v1248
    %v1250 = vpop.f32.mrf.mxu0
    %1251 = vmatprep.mubr.f32.mxu0 0.0
    %1252 = vmatmul.mubr.f32.gmra.mxu0 %v1128
    %v1253 = vpop.f32.mrf.mxu0
    %v1254 = vadd.f32 %v1150, %v1253
    %v1255 = vpop.f32.mrf.mxu0
    %1256 = vdwg.mxu0
    %1257 = vst [vmem:[#allocation13] sm:$0xff] %v1219
    %1258 = vst [vmem:[#allocation13 + $0x8] sm:$0xff] %v1224
    %1259 = vst [vmem:[#allocation13 + $0x10] sm:$0xff] %v1229
    %1260 = vst [vmem:[#allocation13 + $0x18] sm:$0xff] %v1234
    %1261 = vst [vmem:[#allocation13 + $0x20] sm:$0xff] %v1239
    %1262 = vst [vmem:[#allocation13 + $0x28] sm:$0xff] %v1244
    %1263 = vst [vmem:[#allocation13 + $0x30] sm:$0xff] %v1249
    %1264 = vst [vmem:[#allocation13 + $0x38] sm:$0xff] %v1254
    // Predicated region
    $region66: #{tpu_custom_call.1} parent=1 // pred_check
      _
    $region67: #{tpu_custom_call.1} parent=1 // pred_check_branch
      %1266 = sbr.rel (0) target = $region69
    $region68: #{tpu_custom_call.1} parent=1 // pred_region
      %s1268 = ssub.s32 1024, 1024
      %1269 = vsyncadd [#allocation4], %s1268
      %s1270 = sshll.u32 [#allocation13], 4
      %s1271 = int_to_ptr.vmem [resolvable:$true] %s1270
      %1276 = dma.vmem_to_hbm [thread:$0]  %s1271, 1024, %s10, [#allocation4], 128, 128, 8
    $region69: #{tpu_custom_call.1} parent=1 // pred_fallthru
      _
    // Predicated region
    $region70: #{tpu_custom_call.1} parent=1 // pred_check
      _
    $region71: #{tpu_custom_call.1} parent=1 // pred_check_branch
      %1278 = sbr.rel (0) target = $region73
    $region72: #{tpu_custom_call.1} parent=1 // pred_region
      %1279 = dma.done [#allocation4], 1024
    $region73: #{tpu_custom_call.1} parent=1 // pred_fallthru
      _
    %1280 = vsyncpa [#allocation3], 1
    %1281 = vsyncpa [#allocation6], 1
    %1282 = vsyncpa [#allocation9], 1
    %1283 = vsyncpa [#allocation12], 1
    %1284 = vsyncpa [#allocation4], 1

</llo_original>
